<compile_context>
chip_gen: v5e
topology: v5e:2x2
jax: 0.10.0
libtpu: 0.0.40
codegen_flags: <defaults>
</compile_context>

<pallas_src>
import jax
import jax.numpy as jnp
from jax.experimental import pallas as pl
from jax.experimental.pallas import tpu as pltpu


def _round_up(x, m):
    return (x + m - 1) // m * m


def _mlp_kernel(x_ref, wgu_ref, bgu_ref, wd_ref, bd_ref, o_ref, acc_ref):
    """One (token-tile i, hidden-chunk h) step of the SwiGLU MLP."""
    th = wd_ref.shape[0]                      # hidden chunk size (static)
    h_idx = pl.program_id(1)

    @pl.when(h_idx == 0)
    def _init():
        acc_ref[...] = jnp.zeros_like(acc_ref)

    x = x_ref[...]                                                # (tm, D)

    # Fused gate||up projection for this hidden chunk: single MXU pass against
    # the chunk-interleaved (D, 2*th) weight block, f32 accumulation.
    gu = jnp.dot(x, wgu_ref[...], preferred_element_type=jnp.float32)
    gu = gu + bgu_ref[...].astype(jnp.float32)                    # (tm, 2*th)
    gate = gu[:, :th]
    up = gu[:, th:]
    act = gate * jax.nn.sigmoid(gate) * up                        # SiLU * up, f32

    # Partial down-projection for this chunk, accumulated in f32.
    acc_ref[...] += jnp.dot(act.astype(wd_ref.dtype), wd_ref[...],
                            preferred_element_type=jnp.float32)

    @pl.when(h_idx == pl.num_programs(1) - 1)
    def _finalize():
        out = acc_ref[...] + bd_ref[...].astype(jnp.float32)      # bias once
        o_ref[...] = out.astype(o_ref.dtype)


def prepare_qwen2_5_vl_mlp_params(w_gate, b_gate, w_up, b_up, w_down, b_down,
                                  *, th=1024):
    """One-time weight packing (call at load time, NOT per forward).

    Pads H to a lane-aligned multiple of th and chunk-interleaves gate/up
    weights into a single (D, 2*Hp) matrix so each (D, 2*th) block holds
    [gate chunk h | up chunk h].
    """
    D, H = w_gate.shape
    th = max(128, min(int(th), _round_up(H, 128)))
    th = (th // 128) * 128                       # lane-aligned hidden chunk
    Hp = _round_up(H, th)
    n_h = Hp // th
    pad_h = Hp - H

    def pad_cols(w):
        return jnp.pad(w, ((0, 0), (0, pad_h))) if pad_h else w

    w_gate_p = pad_cols(w_gate)
    w_up_p = pad_cols(w_up)
    b_gate_p = pad_cols(b_gate.reshape(1, H))
    b_up_p = pad_cols(b_up.reshape(1, H))
    w_down_p = jnp.pad(w_down, ((0, pad_h), (0, 0))) if pad_h else w_down

    w_gu = jnp.concatenate(
        [w_gate_p.reshape(D, n_h, th), w_up_p.reshape(D, n_h, th)], axis=-1
    ).reshape(D, 2 * Hp)
    b_gu = jnp.concatenate(
        [b_gate_p.reshape(1, n_h, th), b_up_p.reshape(1, n_h, th)], axis=-1
    ).reshape(1, 2 * Hp)

    return {
        "w_gu": w_gu, "b_gu": b_gu,
        "w_down": w_down_p, "b_down": b_down.reshape(1, D),
        "th": th, "Hp": Hp, "H": H, "D": D,
    }


def qwen2_5_vl_mlp(x, params, *, tm=1024, weight_buffers=2):
    """SwiGLU MLP forward.

    x:      (S, D)
    params: output of prepare_qwen2_5_vl_mlp_params (packed/padded weights)
    tm:     token tile.  Use 768-1024 on v6e/v7x; 256-384 is near the v5e knee.
    weight_buffers: pipeline depth for the streamed weight blocks (sweep 2-3
                    if tm is small and the weight DMA tail is exposed).
    returns: (S, D) in x.dtype
    """
    S, D = x.shape
    assert D == params["D"], "in_features mismatch with packed params"
    w_gu, b_gu = params["w_gu"], params["b_gu"]
    w_down, b_down = params["w_down"], params["b_down"]
    th, Hp = params["th"], params["Hp"]
    n_h = Hp // th

    # Token tile: multiple of 16 (bf16 packs two rows per sublane), <= padded S.
    tm = max(16, min(int(tm), _round_up(S, 16)))
    tm = (tm // 16) * 16
    Sp = _round_up(S, tm)
    x_p = jnp.pad(x, ((0, Sp - S), (0, 0))) if Sp != S else x

    grid = (Sp // tm, n_h)

    # Scoped-VMEM estimate for the chosen tiles (buffers + f32 temporaries),
    # so large tm/th don't trip the 32 MiB default; clamped for small configs.
    in_b = x.dtype.itemsize
    w_b = w_gu.dtype.itemsize
    vmem_bytes = (
        2 * tm * D * in_b                       # x tile (double-buffered)
        + weight_buffers * D * 2 * th * w_b     # gate||up weight block
        + weight_buffers * th * D * w_b         # down weight block
        + 2 * (2 * th + D) * w_b                # biases
        + 2 * tm * D * in_b                     # out tile
        + tm * D * 4                            # f32 accumulator
        + 3 * tm * 2 * th * 4                   # f32 gu/act temporaries
    )
    vmem_limit = int(min(max(int(vmem_bytes * 1.25), 32 * 1024 * 1024),
                         128 * 1024 * 1024))

    weight_mode = pl.Buffered(weight_buffers) if weight_buffers != 2 else None

    def wspec(shape, imap):
        if weight_mode is None:
            return pl.BlockSpec(shape, imap)
        return pl.BlockSpec(shape, imap, pipeline_mode=weight_mode)

    # Advisory cost estimate for XLA's scheduler.
    cost = pl.CostEstimate(
        flops=6 * Sp * D * Hp,
        transcendentals=Sp * Hp,
        bytes_accessed=int(
            (Sp // tm) * (w_gu.size + w_down.size) * w_b
            + 2 * Sp * D * in_b),
    )

    out = pl.pallas_call(
        _mlp_kernel,
        out_shape=jax.ShapeDtypeStruct((Sp, D), x.dtype),
        grid_spec=pltpu.PrefetchScalarGridSpec(
            num_scalar_prefetch=0,
            grid=grid,
            in_specs=[
                pl.BlockSpec((tm, D), lambda i, h: (i, 0)),        # x tile
                wspec((D, 2 * th), lambda i, h: (0, h)),           # gate||up w
                pl.BlockSpec((1, 2 * th), lambda i, h: (0, h)),    # gate||up b
                wspec((th, D), lambda i, h: (h, 0)),               # down w
                pl.BlockSpec((1, D), lambda i, h: (0, 0)),         # down b
            ],
            out_specs=pl.BlockSpec((tm, D), lambda i, h: (i, 0)),
            scratch_shapes=[pltpu.VMEM((tm, D), jnp.float32)],     # f32 acc
        ),
        compiler_params=pltpu.CompilerParams(
            dimension_semantics=("parallel", "arbitrary"),
            vmem_limit_bytes=vmem_limit),
        cost_estimate=cost,
    )(x_p, w_gu, b_gu, w_down, b_down)

    return out[:S] if Sp != S else out


def _reference(x, w_gate, b_gate, w_up, b_up, w_down, b_down):
    f32 = jnp.float32
    x = x.astype(f32)
    gate = x @ w_gate.astype(f32) + b_gate.astype(f32)
    gate = gate * jax.nn.sigmoid(gate)
    up = x @ w_up.astype(f32) + b_up.astype(f32)
    return (gate * up) @ w_down.astype(f32) + b_down.astype(f32)


if __name__ == "__main__":
    # Small shapes consistent with the module (seq, in_features, hidden_features).
    # SEQ and HIDDEN are deliberately NOT tile multiples to exercise the
    # padding paths (S -> 768 with tm=256, H=500 -> Hp=512 with th=256).
    SEQ, IN_FEATURES, HIDDEN_FEATURES = 520, 128, 500
    DTYPE = jnp.bfloat16  # bf16 MXU operands, f32 accumulation/elementwise

    key = jax.random.PRNGKey(0)
    kx, kg, kbg, ku, kbu, kd, kbd = jax.random.split(key, 7)

    x = jax.random.normal(kx, (SEQ, IN_FEATURES), jnp.float32).astype(DTYPE)
    w_gate = (jax.random.normal(kg, (IN_FEATURES, HIDDEN_FEATURES), jnp.float32) * 0.05).astype(DTYPE)
    b_gate = (jax.random.normal(kbg, (1, HIDDEN_FEATURES), jnp.float32) * 0.05).astype(DTYPE)
    w_up   = (jax.random.normal(ku, (IN_FEATURES, HIDDEN_FEATURES), jnp.float32) * 0.05).astype(DTYPE)
    b_up   = (jax.random.normal(kbu, (1, HIDDEN_FEATURES), jnp.float32) * 0.05).astype(DTYPE)
    w_down = (jax.random.normal(kd, (HIDDEN_FEATURES, IN_FEATURES), jnp.float32) * 0.05).astype(DTYPE)
    b_down = (jax.random.normal(kbd, (1, IN_FEATURES), jnp.float32) * 0.05).astype(DTYPE)

    # One-time weight packing (load time), then per-call forward.
    params = prepare_qwen2_5_vl_mlp_params(
        w_gate, b_gate, w_up, b_up, w_down, b_down, th=256)
    params = jax.tree_util.tree_map(
        lambda a: jax.block_until_ready(a) if isinstance(a, jax.Array) else a,
        params)

    out = qwen2_5_vl_mlp(x, params, tm=256)
    out = jax.block_until_ready(out)

    ref = _reference(x, w_gate, b_gate, w_up, b_up, w_down, b_down)
    assert out.shape == (SEQ, IN_FEATURES)
    assert jnp.allclose(out.astype(jnp.float32), ref, atol=3e-2, rtol=3e-2), \
        "mismatch vs reference"

    print("KERNEL_OK")
</pallas_src>

<mosaic_0001>
module attributes {stable_mosaic.version = 11 : i64} {
  func.func @_mlp_kernel(%arg0: i32, %arg1: i32, %arg2: memref<256x128xbf16, #tpu.memory_space<vmem>>, %arg3: memref<128x512xbf16, #tpu.memory_space<vmem>>, %arg4: memref<1x512xbf16, #tpu.memory_space<vmem>>, %arg5: memref<256x128xbf16, #tpu.memory_space<vmem>>, %arg6: memref<1x128xbf16, #tpu.memory_space<vmem>>, %arg7: memref<256x128xbf16, #tpu.memory_space<vmem>>, %arg8: memref<256x128xf32, #tpu.memory_space<vmem>>) attributes {dimension_semantics = [#tpu.dimension_semantics<parallel>, #tpu.dimension_semantics<arbitrary>], iteration_bounds = array<i64: 3, 2>, scalar_prefetch = 0 : i64, scratch_operands = 1 : i64, tpu.core_type = #tpu.core_type<tc>, window_params = [{transform_indices = @transform_0, window_bounds = array<i64: 256, 128>}, {transform_indices = @transform_1, window_bounds = array<i64: 128, 512>}, {transform_indices = @transform_2, window_bounds = array<i64: 1, 512>}, {transform_indices = @transform_3, window_bounds = array<i64: 256, 128>}, {pipeline_mode = #tpu.pipeline_mode<synchronous>, transform_indices = @transform_4, window_bounds = array<i64: 1, 128>}, {transform_indices = @transform_5, window_bounds = array<i64: 256, 128>}]} {
    %c0_i32 = arith.constant 0 : i32
    %0 = arith.cmpi eq, %arg1, %c0_i32 : i32
    %1 = arith.extui %0 : i1 to i32
    %c0_i32_0 = arith.constant 0 : i32
    %2 = arith.cmpi ne, %1, %c0_i32_0 : i32
    scf.if %2 {
      %cst_15 = arith.constant 0.000000e+00 : f32
      %28 = vector.broadcast %cst_15 : f32 to vector<256x128xf32>
      %c0_16 = arith.constant 0 : index
      %c0_17 = arith.constant 0 : index
      %29 = vector.load %arg8[%c0_16, %c0_17] : memref<256x128xf32, #tpu.memory_space<vmem>>, vector<256x128xf32>
      tpu.vector_store %arg8[%c0_16, %c0_17], %28 {strides = array<i32>} : memref<256x128xf32, #tpu.memory_space<vmem>>, vector<256x128xf32>,
    } else {
    }
    %c0 = arith.constant 0 : index
    %c0_1 = arith.constant 0 : index
    %3 = vector.load %arg2[%c0, %c0_1] : memref<256x128xbf16, #tpu.memory_space<vmem>>, vector<256x128xbf16>
    %c0_2 = arith.constant 0 : index
    %c0_3 = arith.constant 0 : index
    %4 = vector.load %arg3[%c0_2, %c0_3] : memref<128x512xbf16, #tpu.memory_space<vmem>>, vector<128x512xbf16>
    %cst = arith.constant dense<0.000000e+00> : vector<256x512xf32>
    %5 = tpu.matmul %3, %4, %cst {dimension_numbers = #tpu.dot_dimension_numbers<[1], [0], [0], [1], [0, 0, 1, 1], [], []>} : vector<256x128xbf16>, vector<128x512xbf16>, vector<256x512xf32> -> vector<256x512xf32>
    %c0_4 = arith.constant 0 : index
    %c0_5 = arith.constant 0 : index
    %6 = vector.load %arg4[%c0_4, %c0_5] : memref<1x512xbf16, #tpu.memory_space<vmem>>, vector<1x512xbf16>
    %7 = arith.extf %6 : vector<1x512xbf16> to vector<1x512xf32>
    %8 = vector.broadcast %7 : vector<1x512xf32> to vector<256x512xf32>
    %9 = arith.addf %5, %8 : vector<256x512xf32>
    %10 = vector.extract_strided_slice %9 {offsets = [0, 0], sizes = [256, 256], strides = [1, 1]} : vector<256x512xf32> to vector<256x256xf32>
    %11 = vector.extract_strided_slice %9 {offsets = [0, 256], sizes = [256, 256], strides = [1, 1]} : vector<256x512xf32> to vector<256x256xf32>
    %12 = arith.negf %10 : vector<256x256xf32>
    %13 = math.exp %12 : vector<256x256xf32>
    %cst_6 = arith.constant 1.000000e+00 : f32
    %14 = vector.broadcast %cst_6 : f32 to vector<256x256xf32>
    %15 = arith.addf %14, %13 : vector<256x256xf32>
    %16 = arith.divf %14, %15 : vector<256x256xf32>
    %17 = arith.mulf %10, %16 : vector<256x256xf32>
    %18 = arith.mulf %17, %11 : vector<256x256xf32>
    %c0_7 = arith.constant 0 : index
    %c0_8 = arith.constant 0 : index
    %19 = vector.load %arg8[%c0_7, %c0_8] : memref<256x128xf32, #tpu.memory_space<vmem>>, vector<256x128xf32>
    %20 = arith.truncf %18 : vector<256x256xf32> to vector<256x256xbf16>
    %c0_9 = arith.constant 0 : index
    %c0_10 = arith.constant 0 : index
    %21 = vector.load %arg5[%c0_9, %c0_10] : memref<256x128xbf16, #tpu.memory_space<vmem>>, vector<256x128xbf16>
    %cst_11 = arith.constant dense<0.000000e+00> : vector<256x128xf32>
    %22 = tpu.matmul %20, %21, %cst_11 {dimension_numbers = #tpu.dot_dimension_numbers<[1], [0], [0], [1], [0, 0, 1, 1], [], []>} : vector<256x256xbf16>, vector<256x128xbf16>, vector<256x128xf32> -> vector<256x128xf32>
    %23 = arith.addf %19, %22 : vector<256x128xf32>
    %c0_12 = arith.constant 0 : index
    %c0_13 = arith.constant 0 : index
    %24 = vector.load %arg8[%c0_12, %c0_13] : memref<256x128xf32, #tpu.memory_space<vmem>>, vector<256x128xf32>
    tpu.vector_store %arg8[%c0_12, %c0_13], %23 {strides = array<i32>} : memref<256x128xf32, #tpu.memory_space<vmem>>, vector<256x128xf32>,
    %c1_i32 = arith.constant 1 : i32
    %25 = arith.cmpi eq, %arg1, %c1_i32 : i32
    %26 = arith.extui %25 : i1 to i32
    %c0_i32_14 = arith.constant 0 : i32
    %27 = arith.cmpi ne, %26, %c0_i32_14 : i32
    scf.if %27 {
      %c0_15 = arith.constant 0 : index
      %c0_16 = arith.constant 0 : index
      %28 = vector.load %arg8[%c0_15, %c0_16] : memref<256x128xf32, #tpu.memory_space<vmem>>, vector<256x128xf32>
      %c0_17 = arith.constant 0 : index
      %c0_18 = arith.constant 0 : index
      %29 = vector.load %arg6[%c0_17, %c0_18] : memref<1x128xbf16, #tpu.memory_space<vmem>>, vector<1x128xbf16>
      %30 = arith.extf %29 : vector<1x128xbf16> to vector<1x128xf32>
      %31 = vector.broadcast %30 : vector<1x128xf32> to vector<256x128xf32>
      %32 = arith.addf %28, %31 : vector<256x128xf32>
      %33 = arith.truncf %32 : vector<256x128xf32> to vector<256x128xbf16>
      %c0_19 = arith.constant 0 : index
      %c0_20 = arith.constant 0 : index
      %34 = vector.load %arg7[%c0_19, %c0_20] : memref<256x128xbf16, #tpu.memory_space<vmem>>, vector<256x128xbf16>
      tpu.vector_store %arg7[%c0_19, %c0_20], %33 {strides = array<i32>} : memref<256x128xbf16, #tpu.memory_space<vmem>>, vector<256x128xbf16>,
    } else {
    }
    return
  }
  func.func @transform_0(%arg0: i32, %arg1: i32) -> (i32, i32) {
    %c0_i32 = arith.constant 0 : i32
    %c0_i32_0 = arith.constant 0 : i32
    return %arg0, %c0_i32 : i32, i32
  }
  func.func @transform_1(%arg0: i32, %arg1: i32) -> (i32, i32) {
    %c0_i32 = arith.constant 0 : i32
    %c0_i32_0 = arith.constant 0 : i32
    return %c0_i32, %arg1 : i32, i32
  }
  func.func @transform_2(%arg0: i32, %arg1: i32) -> (i32, i32) {
    %c0_i32 = arith.constant 0 : i32
    %c0_i32_0 = arith.constant 0 : i32
    return %c0_i32, %arg1 : i32, i32
  }
  func.func @transform_3(%arg0: i32, %arg1: i32) -> (i32, i32) {
    %c0_i32 = arith.constant 0 : i32
    %c0_i32_0 = arith.constant 0 : i32
    return %arg1, %c0_i32 : i32, i32
  }
  func.func @transform_4(%arg0: i32, %arg1: i32) -> (i32, i32) {
    %c0_i32 = arith.constant 0 : i32
    %c0_i32_0 = arith.constant 0 : i32
    %c0_i32_1 = arith.constant 0 : i32
    return %c0_i32, %c0_i32_0 : i32, i32
  }
  func.func @transform_5(%arg0: i32, %arg1: i32) -> (i32, i32) {
    %c0_i32 = arith.constant 0 : i32
    %c0_i32_0 = arith.constant 0 : i32
    return %arg0, %c0_i32 : i32, i32
  }
}

</mosaic_0001>

<llo_original>
// kernel: tpu_custom_call.1
$region0: #{tpu_custom_call.1}
  #allocation0 [shape = 'u32[]', space=smem, size = 0x4, offset = 0x4, fixed_abs, tag = 'smem constant byte address 0x4 - core index']
  #allocation1 [shape = 'u32[72,128]{1,0:T(1,128)}', space=vmem, size = 0x9000, scoped, tag = 'internal scratch']
  #allocation2 [shape = 'f32[256,128]{1,0:T(8,128)}', space=vmem, size = 0x20000, scoped, tag = 'scratch operand']
  %s0 = inlined_call_operand.hbm [shape: bf16[768,128], index: 0, kind: input, shape index: {}]
  %s1 = inlined_call_operand.hbm [shape: bf16[128,1024], index: 1, kind: input, shape index: {}]
  %s2 = inlined_call_operand.hbm [shape: bf16[1,1024], index: 2, kind: input, shape index: {}]
  %s3 = inlined_call_operand.hbm [shape: bf16[512,128], index: 3, kind: input, shape index: {}]
  %s4 = inlined_call_operand.vmem [shape: bf16[1,128], index: 4, kind: input, shape index: {}]
  %s5 = inlined_call_operand.hbm [shape: bf16[768,128], index: 5, kind: output, shape index: {}]
  %s6 = sld [smem:[#allocation0]]
  $region77: #{tpu_custom_call.1} parent=0
    _
  %s8 = ssub.s32 1, %s6
  %s9 = scalar_select 0, %s8, %s6
  $region1: #{tpu_custom_call.1} parent=0
    #allocation3 [shape = 'u8[131072]{0}', space=vmem, size = 0x20000, scoped, tag = 'input window, operand 0']
    #allocation4 [shape = 's32[2]{0}', space=sflag, size = 0x8, scoped, tag = 'scoped memory for tpu_custom_call.1']
    #allocation5 [shape = 's32[2]{0}', space=sflag, size = 0x8, scoped, tag = 'scoped memory for tpu_custom_call.1']
    #allocation6 [shape = 'u8[262144]{0}', space=vmem, size = 0x40000, scoped, tag = 'input window, operand 1']
    #allocation7 [shape = 's32[2]{0}', space=sflag, size = 0x8, scoped, tag = 'scoped memory for tpu_custom_call.1']
    #allocation8 [shape = 'u8[4096]{0}', space=vmem, size = 0x1000, scoped, tag = 'input window, operand 2']
    #allocation9 [shape = 'u8[131072]{0}', space=vmem, size = 0x20000, scoped, tag = 'input window, operand 3']
    #allocation10 [shape = 's32[2]{0}', space=sflag, size = 0x8, scoped, tag = 'scoped memory for tpu_custom_call.1']
    #allocation11 [shape = 'u8[131072]{0}', space=vmem, size = 0x20000, scoped, tag = 'output window, operand 0']
    %10 = vsyncpa [#allocation4], 0
    %s11 = scalar_lea.sflag [#allocation4], 1
    %12 = vsyncpa %s11, 0
    %13 = vsyncpa [#allocation7], 0
    %s14 = scalar_lea.sflag [#allocation7], 1
    %15 = vsyncpa %s14, 0
    %16 = vsyncpa [#allocation10], 0
    %s17 = scalar_lea.sflag [#allocation10], 1
    %18 = vsyncpa %s17, 0
    %19 = vsyncpa [#allocation5], 0
    %s20 = scalar_lea.sflag [#allocation5], 1
    %21 = vsyncpa %s20, 0
    loop: start=0, step=1, limit=8
    $region2: #{tpu_custom_call.1} parent=1 // loop_pre_header
      _
    $region3: #{tpu_custom_call.1} parent=1 // loop_header
      %s23 = sphi 0, %s27
      %p24 = scmp.ge.s32.totalorder %s23, 8
      %s30 = sphi 0, %s42
      %s31 = sphi 0, %s38
      %s32 = sphi 0, %s30
      %s33 = sphi 0, %s31
      %s34 = sphi 0, %s32
      %s35 = sphi 0, %s33
      %s45 = sphi 0, %s47
      %s48 = sphi 0, %s45
      %s49 = sphi 0, %s48
      %s65 = sphi 0, %s49
      %s71 = sphi 0, %s73
      %s74 = sphi 0, %s71
      %s75 = sphi 0, %s74
      %s91 = sphi 0, %s75
      %s97 = sphi 0, %s99
      %s100 = sphi 0, %s97
      %s101 = sphi 0, %s100
      %s117 = sphi 0, %s101
      %s123 = sphi 0, %s125
      %s126 = sphi 0, %s123
      %s127 = sphi 0, %s126
      %s143 = sphi 0, %s127
      %s147 = sphi 0, %s147
      %s149 = sphi 0, %s147
      %s150 = sphi 0, %s149
      %s164 = sphi 0, %s150
      %s170 = sphi 0, %s172
      %s173 = sphi 0, %s170
      %s174 = sphi 0, %s173
      %s190 = sphi 0, %s174
    $region4: #{tpu_custom_call.1} parent=1 // loop_header_branch
      %26 = sbr.rel (%p24) target = $region8
    $region5: #{tpu_custom_call.1} parent=1 // loop_body
      %s28 = ssub.s32 %s23, 1
      %s29 = ssub.s32 %s23, 2
      %s36 = sadd.s32 1, %s31
      %p37 = scmp.ge.s32.totalorder %s36, 2
      %s38 = scalar_select %p37, 0, %s36
      %s39 = sadd.s32 1, %s30
      %s40 = scalar_select %p37, %s39, %s30
      %p41 = scmp.ge.s32.totalorder %s40, 3
      %s42 = scalar_select %p41, 0, %s40
      %s43 = ssub.s32 %s30, %s42
      %p44 = scmp.eq.s32.totalorder %s43, 0
      %s46 = sadd.s32 %s45, 1
      %s47 = scalar_select %p44, %s45, %s46
      %p50 = pneg %p44
      %p51 = scmp.eq.s32.totalorder %s23, 5
      %p52 = por %p50, %p51
      %p53 = scmp.ne.s32.totalorder %s45, %s48
      %p54 = scmp.eq.s32.totalorder %s23, 0
      %p55 = por %p53, %p54
      %p56 = scmp.ne.s32.totalorder %s45, %s48
      %p57 = scmp.eq.s32.totalorder %s28, 5
      %p58 = por %p56, %p57
      %p59 = scmp.ne.s32.totalorder %s48, %s49
      %p60 = scmp.eq.s32.totalorder %s28, 0
      %p61 = por %p59, %p60
      %p62 = scmp.ne.s32.totalorder %s48, %s49
      %p63 = scmp.eq.s32.totalorder %s29, 5
      %p64 = por %p62, %p63
      %p66 = scmp.ne.s32.totalorder %s49, %s65
      %p67 = scmp.eq.s32.totalorder %s29, 0
      %p68 = por %p66, %p67
      %s69 = ssub.s32 %s31, %s38
      %p70 = scmp.eq.s32.totalorder %s69, 0
      %s72 = sadd.s32 %s71, 1
      %s73 = scalar_select %p70, %s71, %s72
      %p76 = pneg %p70
      %p77 = scmp.eq.s32.totalorder %s23, 5
      %p78 = por %p76, %p77
      %p79 = scmp.ne.s32.totalorder %s71, %s74
      %p80 = scmp.eq.s32.totalorder %s23, 0
      %p81 = por %p79, %p80
      %p82 = scmp.ne.s32.totalorder %s71, %s74
      %p83 = scmp.eq.s32.totalorder %s28, 5
      %p84 = por %p82, %p83
      %p85 = scmp.ne.s32.totalorder %s74, %s75
      %p86 = scmp.eq.s32.totalorder %s28, 0
      %p87 = por %p85, %p86
      %p88 = scmp.ne.s32.totalorder %s74, %s75
      %p89 = scmp.eq.s32.totalorder %s29, 5
      %p90 = por %p88, %p89
      %p92 = scmp.ne.s32.totalorder %s75, %s91
      %p93 = scmp.eq.s32.totalorder %s29, 0
      %p94 = por %p92, %p93
      %s95 = ssub.s32 %s31, %s38
      %p96 = scmp.eq.s32.totalorder %s95, 0
      %s98 = sadd.s32 %s97, 1
      %s99 = scalar_select %p96, %s97, %s98
      %p102 = pneg %p96
      %p103 = scmp.eq.s32.totalorder %s23, 5
      %p104 = por %p102, %p103
      %p105 = scmp.ne.s32.totalorder %s97, %s100
      %p106 = scmp.eq.s32.totalorder %s23, 0
      %p107 = por %p105, %p106
      %p108 = scmp.ne.s32.totalorder %s97, %s100
      %p109 = scmp.eq.s32.totalorder %s28, 5
      %p110 = por %p108, %p109
      %p111 = scmp.ne.s32.totalorder %s100, %s101
      %p112 = scmp.eq.s32.totalorder %s28, 0
      %p113 = por %p111, %p112
      %p114 = scmp.ne.s32.totalorder %s100, %s101
      %p115 = scmp.eq.s32.totalorder %s29, 5
      %p116 = por %p114, %p115
      %p118 = scmp.ne.s32.totalorder %s101, %s117
      %p119 = scmp.eq.s32.totalorder %s29, 0
      %p120 = por %p118, %p119
      %s121 = ssub.s32 %s31, %s38
      %p122 = scmp.eq.s32.totalorder %s121, 0
      %s124 = sadd.s32 %s123, 1
      %s125 = scalar_select %p122, %s123, %s124
      %p128 = pneg %p122
      %p129 = scmp.eq.s32.totalorder %s23, 5
      %p130 = por %p128, %p129
      %p131 = scmp.ne.s32.totalorder %s123, %s126
      %p132 = scmp.eq.s32.totalorder %s23, 0
      %p133 = por %p131, %p132
      %p134 = scmp.ne.s32.totalorder %s123, %s126
      %p135 = scmp.eq.s32.totalorder %s28, 5
      %p136 = por %p134, %p135
      %p137 = scmp.ne.s32.totalorder %s126, %s127
      %p138 = scmp.eq.s32.totalorder %s28, 0
      %p139 = por %p137, %p138
      %p140 = scmp.ne.s32.totalorder %s126, %s127
      %p141 = scmp.eq.s32.totalorder %s29, 5
      %p142 = por %p140, %p141
      %p144 = scmp.ne.s32.totalorder %s127, %s143
      %p145 = scmp.eq.s32.totalorder %s29, 0
      %p146 = por %p144, %p145
      %s148 = sadd.s32 %s147, 1
      %p151 = scmp.eq.s32.totalorder %s23, 5
      %p152 = scmp.ne.s32.totalorder %s147, %s149
      %p153 = scmp.eq.s32.totalorder %s23, 0
      %p154 = por %p152, %p153
      %p155 = scmp.ne.s32.totalorder %s147, %s149
      %p156 = scmp.eq.s32.totalorder %s28, 5
      %p157 = por %p155, %p156
      %p158 = scmp.ne.s32.totalorder %s149, %s150
      %p159 = scmp.eq.s32.totalorder %s28, 0
      %p160 = por %p158, %p159
      %p161 = scmp.ne.s32.totalorder %s149, %s150
      %p162 = scmp.eq.s32.totalorder %s29, 5
      %p163 = por %p161, %p162
      %p165 = scmp.ne.s32.totalorder %s150, %s164
      %p166 = scmp.eq.s32.totalorder %s29, 0
      %p167 = por %p165, %p166
      %s168 = ssub.s32 %s30, %s42
      %p169 = scmp.eq.s32.totalorder %s168, 0
      %s171 = sadd.s32 %s170, 1
      %s172 = scalar_select %p169, %s170, %s171
      %p175 = pneg %p169
      %p176 = scmp.eq.s32.totalorder %s23, 5
      %p177 = por %p175, %p176
      %p178 = scmp.ne.s32.totalorder %s170, %s173
      %p179 = scmp.eq.s32.totalorder %s23, 0
      %p180 = por %p178, %p179
      %p181 = scmp.ne.s32.totalorder %s170, %s173
      %p182 = scmp.eq.s32.totalorder %s28, 5
      %p183 = por %p181, %p182
      %p184 = scmp.ne.s32.totalorder %s173, %s174
      %p185 = scmp.eq.s32.totalorder %s28, 0
      %p186 = por %p184, %p185
      %p187 = scmp.ne.s32.totalorder %s173, %s174
      %p188 = scmp.eq.s32.totalorder %s29, 5
      %p189 = por %p187, %p188
      %p191 = scmp.ne.s32.totalorder %s174, %s190
      %p192 = scmp.eq.s32.totalorder %s29, 0
      %p193 = por %p191, %p192
      %p194 = scmp.le.s32.totalorder 1, %s23
      %p195 = scmp.lt.s32.totalorder %s23, 7
      %p196 = pnand %p194, %p195
      %p197 = pneg %p196
      // Predicated region
      $region9: #{tpu_custom_call.1} parent=5 // pred_check
        _
      $region10: #{tpu_custom_call.1} parent=5 // pred_check_branch
        %199 = sbr.rel (%p196) target = $region12
      $region11: #{tpu_custom_call.1} parent=5 // pred_region
        %s200 = ssub.s32 %s23, 1
        // Predicated region
        $region13: #{tpu_custom_call.1} parent=11 // pred_check
          %p201 = pneg %p160
        $region14: #{tpu_custom_call.1} parent=11 // pred_check_branch
          %203 = sbr.rel (%p201) target = $region16
        $region15: #{tpu_custom_call.1} parent=11 // pred_region
          _
        $region16: #{tpu_custom_call.1} parent=11 // pred_fallthru
          _
      $region12: #{tpu_custom_call.1} parent=5 // pred_fallthru
        _
      %p204 = scmp.lt.s32.totalorder %s23, 6
      // Predicated region
      $region17: #{tpu_custom_call.1} parent=5 // pred_check
        %p205 = pneg %p204
      $region18: #{tpu_custom_call.1} parent=5 // pred_check_branch
        %207 = sbr.rel (%p205) target = $region20
      $region19: #{tpu_custom_call.1} parent=5 // pred_region
        // Predicated region
        $region21: #{tpu_custom_call.1} parent=19 // pred_check
          %p208 = pneg %p55
        $region22: #{tpu_custom_call.1} parent=19 // pred_check_branch
          %210 = sbr.rel (%p208) target = $region24
        $region23: #{tpu_custom_call.1} parent=19 // pred_region
          %s211 = sand.u32 %s45, 1
          %s212 = scalar_lea.sflag [#allocation4], %s211
          %s213 = sand.u32 %s45, 1
          %s214 = smul.addr %s213, 128
          %s215 = scalar_lea.vmem [#allocation3], %s214
          %s216 = smul.u32 32, %s30
          %218 = vsyncadd %s212, 0
          %s219 = smul.addr %s216, 4
          %s220 = scalar_lea.hbm %s0, %s219
          %s221 = sshll.u32 %s220, 4
          %s222 = int_to_ptr.hbm [resolvable:$true] %s221
          %s223 = sshll.u32 %s215, 4
          %s224 = int_to_ptr.vmem [resolvable:$true] %s223
          %229 = dma.hbm_to_vmem [thread:$0]  %s222, 2048, %s224, %s212, 64, 64, 4
        $region24: #{tpu_custom_call.1} parent=19 // pred_fallthru
          _
        // Predicated region
        $region25: #{tpu_custom_call.1} parent=19 // pred_check
          %p230 = pneg %p81
        $region26: #{tpu_custom_call.1} parent=19 // pred_check_branch
          %232 = sbr.rel (%p230) target = $region28
        $region27: #{tpu_custom_call.1} parent=19 // pred_region
          %s233 = sand.u32 %s23, 1
          %s234 = scalar_lea.sflag [#allocation7], %s233
          %s235 = sand.u32 %s71, 1
          %s236 = smul.addr %s235, 256
          %s237 = scalar_lea.vmem [#allocation6], %s236
          %s238 = smul.u32 4, %s31
          %240 = vsyncadd %s234, 0
          %s241 = smul.addr %s238, 4
          %s242 = scalar_lea.hbm %s1, %s241
          %s243 = sshll.u32 %s242, 4
          %s244 = int_to_ptr.hbm [resolvable:$true] %s243
          %s245 = sshll.u32 %s237, 4
          %s246 = int_to_ptr.vmem [resolvable:$true] %s245
          %251 = dma.hbm_to_vmem [thread:$0]  %s244, 4096, %s246, %s234, 512, 256, 16
        $region28: #{tpu_custom_call.1} parent=19 // pred_fallthru
          _
        // Predicated region
        $region29: #{tpu_custom_call.1} parent=19 // pred_check
          %p252 = pneg %p107
        $region30: #{tpu_custom_call.1} parent=19 // pred_check_branch
          %254 = sbr.rel (%p252) target = $region32
        $region31: #{tpu_custom_call.1} parent=19 // pred_region
          %s255 = sand.u32 %s23, 1
          %s256 = scalar_lea.sflag [#allocation7], %s255
          %s257 = sand.u32 %s97, 1
          %s258 = smul.addr %s257, 4
          %s259 = scalar_lea.vmem [#allocation8], %s258
          %s260 = smul.u32 4, %s31
          %262 = vsyncadd %s256, 0
          %s263 = scalar_lea.hbm %s2, %s260
          %s265 = sshll.u32 %s263, 4
          %s266 = int_to_ptr.hbm [resolvable:$true] %s265
          %s267 = sshll.u32 %s259, 4
          %s268 = int_to_ptr.vmem [resolvable:$true] %s267
          %270 = dma.hbm_to_vmem [thread:$0]  %s266, 64, %s268, %s256
        $region32: #{tpu_custom_call.1} parent=19 // pred_fallthru
          _
        // Predicated region
        $region33: #{tpu_custom_call.1} parent=19 // pred_check
          %p271 = pneg %p133
        $region34: #{tpu_custom_call.1} parent=19 // pred_check_branch
          %273 = sbr.rel (%p271) target = $region36
        $region35: #{tpu_custom_call.1} parent=19 // pred_region
          %s274 = sand.u32 %s123, 1
          %s275 = scalar_lea.sflag [#allocation10], %s274
          %s276 = sand.u32 %s123, 1
          %s277 = smul.addr %s276, 128
          %s278 = scalar_lea.vmem [#allocation9], %s277
          %s279 = smul.u32 32, %s31
          %281 = vsyncadd %s275, 0
          %s282 = smul.addr %s279, 4
          %s283 = scalar_lea.hbm %s3, %s282
          %s284 = sshll.u32 %s283, 4
          %s285 = int_to_ptr.hbm [resolvable:$true] %s284
          %s286 = sshll.u32 %s278, 4
          %s287 = int_to_ptr.vmem [resolvable:$true] %s286
          %292 = dma.hbm_to_vmem [thread:$0]  %s285, 2048, %s287, %s275, 64, 64, 4
        $region36: #{tpu_custom_call.1} parent=19 // pred_fallthru
          _
      $region20: #{tpu_custom_call.1} parent=5 // pred_fallthru
        _
      %p293 = scmp.le.s32.totalorder 1, %s23
      %p294 = scmp.lt.s32.totalorder %s23, 7
      %p295 = pnand %p293, %p294
      %p296 = pneg %p295
      // Predicated region
      $region37: #{tpu_custom_call.1} parent=5 // pred_check
        _
      $region38: #{tpu_custom_call.1} parent=5 // pred_check_branch
        %298 = sbr.rel (%p295) target = $region40
      $region39: #{tpu_custom_call.1} parent=5 // pred_region
        %s299 = ssub.s32 %s23, 1
        %s300 = sand.u32 %s48, 1
        %s301 = scalar_lea.sflag [#allocation4], %s300
        %s302 = sand.u32 %s48, 1
        %s303 = smul.addr %s302, 128
        %s304 = scalar_lea.vmem [#allocation3], %s303
        // Predicated region
        $region41: #{tpu_custom_call.1} parent=39 // pred_check
          %p305 = pneg %p61
        $region42: #{tpu_custom_call.1} parent=39 // pred_check_branch
          %307 = sbr.rel (%p305) target = $region44
        $region43: #{tpu_custom_call.1} parent=39 // pred_region
          %309 = dma.done %s301, 2048
        $region44: #{tpu_custom_call.1} parent=39 // pred_fallthru
          _
        %s310 = sand.u32 %s28, 1
        %s311 = scalar_lea.sflag [#allocation7], %s310
        %s312 = sand.u32 %s74, 1
        %s313 = smul.addr %s312, 256
        %s314 = scalar_lea.vmem [#allocation6], %s313
        // Predicated region
        $region45: #{tpu_custom_call.1} parent=39 // pred_check
          %p315 = pneg %p87
        $region46: #{tpu_custom_call.1} parent=39 // pred_check_branch
          %317 = sbr.rel (%p315) target = $region48
        $region47: #{tpu_custom_call.1} parent=39 // pred_region
          %319 = dma.done %s311, 4096
        $region48: #{tpu_custom_call.1} parent=39 // pred_fallthru
          _
        %s320 = sand.u32 %s28, 1
        %s321 = scalar_lea.sflag [#allocation7], %s320
        %s322 = sand.u32 %s100, 1
        %s323 = smul.addr %s322, 4
        %s324 = scalar_lea.vmem [#allocation8], %s323
        // Predicated region
        $region49: #{tpu_custom_call.1} parent=39 // pred_check
          %p325 = pneg %p113
        $region50: #{tpu_custom_call.1} parent=39 // pred_check_branch
          %327 = sbr.rel (%p325) target = $region52
        $region51: #{tpu_custom_call.1} parent=39 // pred_region
          %329 = dma.done %s321, 64
        $region52: #{tpu_custom_call.1} parent=39 // pred_fallthru
          _
        %s330 = sand.u32 %s126, 1
        %s331 = scalar_lea.sflag [#allocation10], %s330
        %s332 = sand.u32 %s126, 1
        %s333 = smul.addr %s332, 128
        %s334 = scalar_lea.vmem [#allocation9], %s333
        // Predicated region
        $region53: #{tpu_custom_call.1} parent=39 // pred_check
          %p335 = pneg %p139
        $region54: #{tpu_custom_call.1} parent=39 // pred_check_branch
          %337 = sbr.rel (%p335) target = $region56
        $region55: #{tpu_custom_call.1} parent=39 // pred_region
          %339 = dma.done %s331, 2048
        $region56: #{tpu_custom_call.1} parent=39 // pred_fallthru
          _
        %s340 = sand.u32 %s48, 1
        %s341 = scalar_lea.sflag [#allocation4], %s340
        %s342 = sand.u32 %s48, 1
        %s343 = smul.addr %s342, 128
        %s344 = scalar_lea.vmem [#allocation3], %s343
        %p345 = pneg %p61
        %p346 = pneg %p58
        %s347 = sand.u32 %s28, 1
        %s348 = scalar_lea.sflag [#allocation7], %s347
        %s349 = sand.u32 %s74, 1
        %s350 = smul.addr %s349, 256
        %s351 = scalar_lea.vmem [#allocation6], %s350
        %p352 = pneg %p87
        %p353 = pneg %p84
        %s354 = sand.u32 %s28, 1
        %s355 = scalar_lea.sflag [#allocation7], %s354
        %s356 = sand.u32 %s100, 1
        %s357 = smul.addr %s356, 4
        %s358 = scalar_lea.vmem [#allocation8], %s357
        %p359 = pneg %p113
        %p360 = pneg %p110
        %s361 = sand.u32 %s126, 1
        %s362 = scalar_lea.sflag [#allocation10], %s361
        %s363 = sand.u32 %s126, 1
        %s364 = smul.addr %s363, 128
        %s365 = scalar_lea.vmem [#allocation9], %s364
        %p366 = pneg %p139
        %p367 = pneg %p136
        %p368 = pneg %p160
        %p369 = pneg %p157
        %p370 = pneg %p186
        %p371 = pneg %p183
        %s372 = sand.u32 %s173, 1
        %s373 = scalar_lea.sflag [#allocation5], %s372
        %s374 = sand.u32 %s173, 1
        %s375 = smul.addr %s374, 128
        %s376 = scalar_lea.vmem [#allocation11], %s375
        %s377 = smul.u32 32, %s32
        %s378 = smul.u32 4, %s33
        %s379 = smul.u32 4, %s33
        %s380 = smul.u32 32, %s33
        %s381 = smul.u32 32, %s32
        %p382 = scmp.eq.s32.totalorder %s33, 0
        // Predicated region
        $region57: #{tpu_custom_call.1} parent=39 // pred_check
          %p383 = pneg %p382
        $region58: #{tpu_custom_call.1} parent=39 // pred_check_branch
          %385 = sbr.rel (%p383) target = $region60
        $region59: #{tpu_custom_call.1} parent=39 // pred_region
          %386 = vst [vmem:[#allocation2] sm:$0xff] 0.0
          %387 = vst [vmem:[#allocation2 + $0x8] sm:$0xff] 0.0
          %388 = vst [vmem:[#allocation2 + $0x10] sm:$0xff] 0.0
          %389 = vst [vmem:[#allocation2 + $0x18] sm:$0xff] 0.0
          %390 = vst [vmem:[#allocation2 + $0x20] sm:$0xff] 0.0
          %391 = vst [vmem:[#allocation2 + $0x28] sm:$0xff] 0.0
          %392 = vst [vmem:[#allocation2 + $0x30] sm:$0xff] 0.0
          %393 = vst [vmem:[#allocation2 + $0x38] sm:$0xff] 0.0
          %394 = vst [vmem:[#allocation2 + $0x40] sm:$0xff] 0.0
          %395 = vst [vmem:[#allocation2 + $0x48] sm:$0xff] 0.0
          %396 = vst [vmem:[#allocation2 + $0x50] sm:$0xff] 0.0
          %397 = vst [vmem:[#allocation2 + $0x58] sm:$0xff] 0.0
          %398 = vst [vmem:[#allocation2 + $0x60] sm:$0xff] 0.0
          %399 = vst [vmem:[#allocation2 + $0x68] sm:$0xff] 0.0
          %400 = vst [vmem:[#allocation2 + $0x70] sm:$0xff] 0.0
          %401 = vst [vmem:[#allocation2 + $0x78] sm:$0xff] 0.0
          %402 = vst [vmem:[#allocation2 + $0x80] sm:$0xff] 0.0
          %403 = vst [vmem:[#allocation2 + $0x88] sm:$0xff] 0.0
          %404 = vst [vmem:[#allocation2 + $0x90] sm:$0xff] 0.0
          %405 = vst [vmem:[#allocation2 + $0x98] sm:$0xff] 0.0
          %406 = vst [vmem:[#allocation2 + $0xa0] sm:$0xff] 0.0
          %407 = vst [vmem:[#allocation2 + $0xa8] sm:$0xff] 0.0
          %408 = vst [vmem:[#allocation2 + $0xb0] sm:$0xff] 0.0
          %409 = vst [vmem:[#allocation2 + $0xb8] sm:$0xff] 0.0
          %410 = vst [vmem:[#allocation2 + $0xc0] sm:$0xff] 0.0
          %411 = vst [vmem:[#allocation2 + $0xc8] sm:$0xff] 0.0
          %412 = vst [vmem:[#allocation2 + $0xd0] sm:$0xff] 0.0
          %413 = vst [vmem:[#allocation2 + $0xd8] sm:$0xff] 0.0
          %414 = vst [vmem:[#allocation2 + $0xe0] sm:$0xff] 0.0
          %415 = vst [vmem:[#allocation2 + $0xe8] sm:$0xff] 0.0
          %416 = vst [vmem:[#allocation2 + $0xf0] sm:$0xff] 0.0
          %417 = vst [vmem:[#allocation2 + $0xf8] sm:$0xff] 0.0
        $region60: #{tpu_custom_call.1} parent=39 // pred_fallthru
          _
        %v418 = vld [vmem:[%s304] sm:$0xf]
        %v419 = vld [vmem:[%s304 + $0x4] sm:$0xf]
        %v420 = vld [vmem:[%s304 + $0x8] sm:$0xf]
        %v421 = vld [vmem:[%s304 + $0xc] sm:$0xf]
        %v422 = vld [vmem:[%s304 + $0x10] sm:$0xf]
        %v423 = vld [vmem:[%s304 + $0x14] sm:$0xf]
        %v424 = vld [vmem:[%s304 + $0x18] sm:$0xf]
        %v425 = vld [vmem:[%s304 + $0x1c] sm:$0xf]
        %v426 = vld [vmem:[%s304 + $0x20] sm:$0xf]
        %v427 = vld [vmem:[%s304 + $0x24] sm:$0xf]
        %v428 = vld [vmem:[%s304 + $0x28] sm:$0xf]
        %v429 = vld [vmem:[%s304 + $0x2c] sm:$0xf]
        %v430 = vld [vmem:[%s304 + $0x30] sm:$0xf]
        %v431 = vld [vmem:[%s304 + $0x34] sm:$0xf]
        %v432 = vld [vmem:[%s304 + $0x38] sm:$0xf]
        %v433 = vld [vmem:[%s304 + $0x3c] sm:$0xf]
        %v434 = vld [vmem:[%s304 + $0x40] sm:$0xf]
        %v435 = vld [vmem:[%s304 + $0x44] sm:$0xf]
        %v436 = vld [vmem:[%s304 + $0x48] sm:$0xf]
        %v437 = vld [vmem:[%s304 + $0x4c] sm:$0xf]
        %v438 = vld [vmem:[%s304 + $0x50] sm:$0xf]
        %v439 = vld [vmem:[%s304 + $0x54] sm:$0xf]
        %v440 = vld [vmem:[%s304 + $0x58] sm:$0xf]
        %v441 = vld [vmem:[%s304 + $0x5c] sm:$0xf]
        %v442 = vld [vmem:[%s304 + $0x60] sm:$0xf]
        %v443 = vld [vmem:[%s304 + $0x64] sm:$0xf]
        %v444 = vld [vmem:[%s304 + $0x68] sm:$0xf]
        %v445 = vld [vmem:[%s304 + $0x6c] sm:$0xf]
        %v446 = vld [vmem:[%s304 + $0x70] sm:$0xf]
        %v447 = vld [vmem:[%s304 + $0x74] sm:$0xf]
        %v448 = vld [vmem:[%s304 + $0x78] sm:$0xf]
        %v449 = vld [vmem:[%s304 + $0x7c] sm:$0xf]
        %v450 = vld [vmem:[%s314] sm:$0xff]
        %v451 = vld [vmem:[%s314 + $0x8] sm:$0xff]
        %v452 = vld [vmem:[%s314 + $0x10] sm:$0xff]
        %v453 = vld [vmem:[%s314 + $0x18] sm:$0xff]
        %v454 = vld [vmem:[%s314 + $0x20] sm:$0xff]
        %v455 = vld [vmem:[%s314 + $0x28] sm:$0xff]
        %v456 = vld [vmem:[%s314 + $0x30] sm:$0xff]
        %v457 = vld [vmem:[%s314 + $0x38] sm:$0xff]
        %v458 = vld [vmem:[%s314 + $0x40] sm:$0xff]
        %v459 = vld [vmem:[%s314 + $0x48] sm:$0xff]
        %v460 = vld [vmem:[%s314 + $0x50] sm:$0xff]
        %v461 = vld [vmem:[%s314 + $0x58] sm:$0xff]
        %v462 = vld [vmem:[%s314 + $0x60] sm:$0xff]
        %v463 = vld [vmem:[%s314 + $0x68] sm:$0xff]
        %v464 = vld [vmem:[%s314 + $0x70] sm:$0xff]
        %v465 = vld [vmem:[%s314 + $0x78] sm:$0xff]
        %v466 = vld [vmem:[%s314 + $0x80] sm:$0xff]
        %v467 = vld [vmem:[%s314 + $0x88] sm:$0xff]
        %v468 = vld [vmem:[%s314 + $0x90] sm:$0xff]
        %v469 = vld [vmem:[%s314 + $0x98] sm:$0xff]
        %v470 = vld [vmem:[%s314 + $0xa0] sm:$0xff]
        %v471 = vld [vmem:[%s314 + $0xa8] sm:$0xff]
        %v472 = vld [vmem:[%s314 + $0xb0] sm:$0xff]
        %v473 = vld [vmem:[%s314 + $0xb8] sm:$0xff]
        %v474 = vld [vmem:[%s314 + $0xc0] sm:$0xff]
        %v475 = vld [vmem:[%s314 + $0xc8] sm:$0xff]
        %v476 = vld [vmem:[%s314 + $0xd0] sm:$0xff]
        %v477 = vld [vmem:[%s314 + $0xd8] sm:$0xff]
        %v478 = vld [vmem:[%s314 + $0xe0] sm:$0xff]
        %v479 = vld [vmem:[%s314 + $0xe8] sm:$0xff]
        %v480 = vld [vmem:[%s314 + $0xf0] sm:$0xff]
        %v481 = vld [vmem:[%s314 + $0xf8] sm:$0xff]
        %v482 = vld [vmem:[%s324] sm:$0xf]
        %v483 = vunpack.c.l.bf16 %v482
        %v485 = vperm.slane %v483, 0
        %v486 = vperm.slane %v483, 2
        %v487 = vperm.slane %v483, 4
        %v488 = vperm.slane %v483, 6
        %v493 = vperm.slane %v485, 0
        %v494 = vperm.slane %v486, 0
        %v495 = vperm.slane %v487, 0
        %v496 = vperm.slane %v488, 0
        %v529 = vunpack.c.l.b16 %v418
        %v530 = vunpack.c.l.b16 %v419
        %v531 = vunpack.c.l.b16 %v420
        %v532 = vunpack.c.l.b16 %v421
        %v533 = vunpack.c.l.b16 %v422
        %v534 = vunpack.c.l.b16 %v423
        %v535 = vunpack.c.l.b16 %v424
        %v536 = vunpack.c.l.b16 %v425
        %v537 = vunpack.c.l.b16 %v426
        %v538 = vunpack.c.l.b16 %v427
        %v539 = vunpack.c.l.b16 %v428
        %v540 = vunpack.c.l.b16 %v429
        %v541 = vunpack.c.l.b16 %v430
        %v542 = vunpack.c.l.b16 %v431
        %v543 = vunpack.c.l.b16 %v432
        %v544 = vunpack.c.l.b16 %v433
        %v545 = vunpack.c.l.b16 %v434
        %v546 = vunpack.c.l.b16 %v435
        %v547 = vunpack.c.l.b16 %v436
        %v548 = vunpack.c.l.b16 %v437
        %v549 = vunpack.c.l.b16 %v438
        %v550 = vunpack.c.l.b16 %v439
        %v551 = vunpack.c.l.b16 %v440
        %v552 = vunpack.c.l.b16 %v441
        %v553 = vunpack.c.l.b16 %v442
        %v554 = vunpack.c.l.b16 %v443
        %v555 = vunpack.c.l.b16 %v444
        %v556 = vunpack.c.l.b16 %v445
        %v557 = vunpack.c.l.b16 %v446
        %v558 = vunpack.c.l.b16 %v447
        %v559 = vunpack.c.l.b16 %v448
        %v560 = vunpack.c.l.b16 %v449
        %v561 = vpack.c.b16 %v530, %v529
        %v562 = vpack.c.b16 %v532, %v531
        %v563 = vpack.c.b16 %v534, %v533
        %v564 = vpack.c.b16 %v536, %v535
        %v565 = vpack.c.b16 %v538, %v537
        %v566 = vpack.c.b16 %v540, %v539
        %v567 = vpack.c.b16 %v542, %v541
        %v568 = vpack.c.b16 %v544, %v543
        %v569 = vpack.c.b16 %v546, %v545
        %v570 = vpack.c.b16 %v548, %v547
        %v571 = vpack.c.b16 %v550, %v549
        %v572 = vpack.c.b16 %v552, %v551
        %v573 = vpack.c.b16 %v554, %v553
        %v574 = vpack.c.b16 %v556, %v555
        %v575 = vpack.c.b16 %v558, %v557
        %v576 = vpack.c.b16 %v560, %v559
        %v625 = vunpack.c.l.b16 %v450
        %v626 = vunpack.c.h.b16 %v450
        %v627 = vunpack.c.l.b16 %v451
        %v628 = vunpack.c.h.b16 %v451
        %v629 = vunpack.c.l.b16 %v452
        %v630 = vunpack.c.h.b16 %v452
        %v631 = vunpack.c.l.b16 %v453
        %v632 = vunpack.c.h.b16 %v453
        %v633 = vunpack.c.l.b16 %v454
        %v634 = vunpack.c.h.b16 %v454
        %v635 = vunpack.c.l.b16 %v455
        %v636 = vunpack.c.h.b16 %v455
        %v637 = vunpack.c.l.b16 %v456
        %v638 = vunpack.c.h.b16 %v456
        %v639 = vunpack.c.l.b16 %v457
        %v640 = vunpack.c.h.b16 %v457
        %v641 = vunpack.c.l.b16 %v458
        %v642 = vunpack.c.h.b16 %v458
        %v643 = vunpack.c.l.b16 %v459
        %v644 = vunpack.c.h.b16 %v459
        %v645 = vunpack.c.l.b16 %v460
        %v646 = vunpack.c.h.b16 %v460
        %v647 = vunpack.c.l.b16 %v461
        %v648 = vunpack.c.h.b16 %v461
        %v649 = vunpack.c.l.b16 %v462
        %v650 = vunpack.c.h.b16 %v462
        %v651 = vunpack.c.l.b16 %v463
        %v652 = vunpack.c.h.b16 %v463
        %v653 = vunpack.c.l.b16 %v464
        %v654 = vunpack.c.h.b16 %v464
        %v655 = vunpack.c.l.b16 %v465
        %v656 = vunpack.c.h.b16 %v465
        %v657 = vunpack.c.l.b16 %v466
        %v658 = vunpack.c.h.b16 %v466
        %v659 = vunpack.c.l.b16 %v467
        %v660 = vunpack.c.h.b16 %v467
        %v661 = vunpack.c.l.b16 %v468
        %v662 = vunpack.c.h.b16 %v468
        %v663 = vunpack.c.l.b16 %v469
        %v664 = vunpack.c.h.b16 %v469
        %v665 = vunpack.c.l.b16 %v470
        %v666 = vunpack.c.h.b16 %v470
        %v667 = vunpack.c.l.b16 %v471
        %v668 = vunpack.c.h.b16 %v471
        %v669 = vunpack.c.l.b16 %v472
        %v670 = vunpack.c.h.b16 %v472
        %v671 = vunpack.c.l.b16 %v473
        %v672 = vunpack.c.h.b16 %v473
        %v673 = vunpack.c.l.b16 %v474
        %v674 = vunpack.c.h.b16 %v474
        %v675 = vunpack.c.l.b16 %v475
        %v676 = vunpack.c.h.b16 %v475
        %v677 = vunpack.c.l.b16 %v476
        %v678 = vunpack.c.h.b16 %v476
        %v679 = vunpack.c.l.b16 %v477
        %v680 = vunpack.c.h.b16 %v477
        %v681 = vunpack.c.l.b16 %v478
        %v682 = vunpack.c.h.b16 %v478
        %v683 = vunpack.c.l.b16 %v479
        %v684 = vunpack.c.h.b16 %v479
        %v685 = vunpack.c.l.b16 %v480
        %v686 = vunpack.c.h.b16 %v480
        %v687 = vunpack.c.l.b16 %v481
        %v688 = vunpack.c.h.b16 %v481
        %v689 = vpack.c.b16 %v629, %v625
        %v690 = vpack.c.b16 %v630, %v626
        %v691 = vpack.c.b16 %v631, %v627
        %v692 = vpack.c.b16 %v632, %v628
        %v693 = vpack.c.b16 %v637, %v633
        %v694 = vpack.c.b16 %v638, %v634
        %v695 = vpack.c.b16 %v639, %v635
        %v696 = vpack.c.b16 %v640, %v636
        %v697 = vpack.c.b16 %v645, %v641
        %v698 = vpack.c.b16 %v646, %v642
        %v699 = vpack.c.b16 %v647, %v643
        %v700 = vpack.c.b16 %v648, %v644
        %v701 = vpack.c.b16 %v653, %v649
        %v702 = vpack.c.b16 %v654, %v650
        %v703 = vpack.c.b16 %v655, %v651
        %v704 = vpack.c.b16 %v656, %v652
        %v705 = vpack.c.b16 %v661, %v657
        %v706 = vpack.c.b16 %v662, %v658
        %v707 = vpack.c.b16 %v663, %v659
        %v708 = vpack.c.b16 %v664, %v660
        %v709 = vpack.c.b16 %v669, %v665
        %v710 = vpack.c.b16 %v670, %v666
        %v711 = vpack.c.b16 %v671, %v667
        %v712 = vpack.c.b16 %v672, %v668
        %v713 = vpack.c.b16 %v677, %v673
        %v714 = vpack.c.b16 %v678, %v674
        %v715 = vpack.c.b16 %v679, %v675
        %v716 = vpack.c.b16 %v680, %v676
        %v717 = vpack.c.b16 %v685, %v681
        %v718 = vpack.c.b16 %v686, %v682
        %v719 = vpack.c.b16 %v687, %v683
        %v720 = vpack.c.b16 %v688, %v684
        %753 = vmatpush.bf16.msra.mxu0 %v717
        %754 = vmatpush.bf16.msra.mxu0 %v713
        %755 = vmatpush.bf16.msra.mxu0 %v709
        %756 = vmatpush.bf16.msra.mxu0 %v705
        %757 = vmatpush.bf16.msra.mxu0 %v701
        %758 = vmatpush.bf16.msra.mxu0 %v697
        %759 = vmatpush.bf16.msra.mxu0 %v693
        %760 = vmatpush.bf16.msra.mxu0 %v689
        %761 = vmatmul.bf16.gmra.mxu0 %v561
        %v762 = vpop.f32.mrf.mxu0
        %v763 = vadd.f32 %v493, %v762
        %v764 = vpop.f32.mrf.mxu0
        %v765 = vadd.f32 %v493, %v764
        %766 = vmatmul.bf16.gmra.mxu0 %v562
        %v767 = vpop.f32.mrf.mxu0
        %v768 = vadd.f32 %v493, %v767
        %v769 = vpop.f32.mrf.mxu0
        %v770 = vadd.f32 %v493, %v769
        %771 = vmatmul.bf16.gmra.mxu0 %v563
        %v772 = vpop.f32.mrf.mxu0
        %v773 = vadd.f32 %v493, %v772
        %v774 = vpop.f32.mrf.mxu0
        %v775 = vadd.f32 %v493, %v774
        %776 = vmatmul.bf16.gmra.mxu0 %v564
        %v777 = vpop.f32.mrf.mxu0
        %v778 = vadd.f32 %v493, %v777
        %v779 = vpop.f32.mrf.mxu0
        %v780 = vadd.f32 %v493, %v779
        %781 = vmatmul.bf16.gmra.mxu0 %v565
        %v782 = vpop.f32.mrf.mxu0
        %v783 = vadd.f32 %v493, %v782
        %v784 = vpop.f32.mrf.mxu0
        %v785 = vadd.f32 %v493, %v784
        %786 = vmatmul.bf16.gmra.mxu0 %v566
        %v787 = vpop.f32.mrf.mxu0
        %v788 = vadd.f32 %v493, %v787
        %v789 = vpop.f32.mrf.mxu0
        %v790 = vadd.f32 %v493, %v789
        %791 = vmatmul.bf16.gmra.mxu0 %v567
        %v792 = vpop.f32.mrf.mxu0
        %v793 = vadd.f32 %v493, %v792
        %v794 = vpop.f32.mrf.mxu0
        %v795 = vadd.f32 %v493, %v794
        %796 = vmatmul.bf16.gmra.mxu0 %v568
        %v797 = vpop.f32.mrf.mxu0
        %v798 = vadd.f32 %v493, %v797
        %v799 = vpop.f32.mrf.mxu0
        %v800 = vadd.f32 %v493, %v799
        %801 = vmatmul.bf16.gmra.mxu0 %v569
        %v802 = vpop.f32.mrf.mxu0
        %v803 = vadd.f32 %v493, %v802
        %v804 = vpop.f32.mrf.mxu0
        %v805 = vadd.f32 %v493, %v804
        %806 = vmatmul.bf16.gmra.mxu0 %v570
        %v807 = vpop.f32.mrf.mxu0
        %v808 = vadd.f32 %v493, %v807
        %v809 = vpop.f32.mrf.mxu0
        %v810 = vadd.f32 %v493, %v809
        %811 = vmatmul.bf16.gmra.mxu0 %v571
        %v812 = vpop.f32.mrf.mxu0
        %v813 = vadd.f32 %v493, %v812
        %v814 = vpop.f32.mrf.mxu0
        %v815 = vadd.f32 %v493, %v814
        %816 = vmatmul.bf16.gmra.mxu0 %v572
        %v817 = vpop.f32.mrf.mxu0
        %v818 = vadd.f32 %v493, %v817
        %v819 = vpop.f32.mrf.mxu0
        %v820 = vadd.f32 %v493, %v819
        %821 = vmatmul.bf16.gmra.mxu0 %v573
        %v822 = vpop.f32.mrf.mxu0
        %v823 = vadd.f32 %v493, %v822
        %v824 = vpop.f32.mrf.mxu0
        %v825 = vadd.f32 %v493, %v824
        %826 = vmatmul.bf16.gmra.mxu0 %v574
        %v827 = vpop.f32.mrf.mxu0
        %v828 = vadd.f32 %v493, %v827
        %v829 = vpop.f32.mrf.mxu0
        %v830 = vadd.f32 %v493, %v829
        %831 = vmatmul.bf16.gmra.mxu0 %v575
        %v832 = vpop.f32.mrf.mxu0
        %v833 = vadd.f32 %v493, %v832
        %v834 = vpop.f32.mrf.mxu0
        %v835 = vadd.f32 %v493, %v834
        %836 = vmatmul.bf16.gmra.mxu0 %v576
        %v837 = vpop.f32.mrf.mxu0
        %v838 = vadd.f32 %v493, %v837
        %v839 = vpop.f32.mrf.mxu0
        %v840 = vadd.f32 %v493, %v839
        %841 = vdwg.mxu0
        %842 = vmatpush.bf16.msra.mxu0 %v718
        %843 = vmatpush.bf16.msra.mxu0 %v714
        %844 = vmatpush.bf16.msra.mxu0 %v710
        %845 = vmatpush.bf16.msra.mxu0 %v706
        %846 = vmatpush.bf16.msra.mxu0 %v702
        %847 = vmatpush.bf16.msra.mxu0 %v698
        %848 = vmatpush.bf16.msra.mxu0 %v694
        %849 = vmatpush.bf16.msra.mxu0 %v690
        %850 = vmatmul.bf16.gmra.mxu0 %v561
        %v851 = vpop.f32.mrf.mxu0
        %v852 = vadd.f32 %v494, %v851
        %v853 = vpop.f32.mrf.mxu0
        %v854 = vadd.f32 %v494, %v853
        %855 = vmatmul.bf16.gmra.mxu0 %v562
        %v856 = vpop.f32.mrf.mxu0
        %v857 = vadd.f32 %v494, %v856
        %v858 = vpop.f32.mrf.mxu0
        %v859 = vadd.f32 %v494, %v858
        %860 = vmatmul.bf16.gmra.mxu0 %v563
        %v861 = vpop.f32.mrf.mxu0
        %v862 = vadd.f32 %v494, %v861
        %v863 = vpop.f32.mrf.mxu0
        %v864 = vadd.f32 %v494, %v863
        %865 = vmatmul.bf16.gmra.mxu0 %v564
        %v866 = vpop.f32.mrf.mxu0
        %v867 = vadd.f32 %v494, %v866
        %v868 = vpop.f32.mrf.mxu0
        %v869 = vadd.f32 %v494, %v868
        %870 = vmatmul.bf16.gmra.mxu0 %v565
        %v871 = vpop.f32.mrf.mxu0
        %v872 = vadd.f32 %v494, %v871
        %v873 = vpop.f32.mrf.mxu0
        %v874 = vadd.f32 %v494, %v873
        %875 = vmatmul.bf16.gmra.mxu0 %v566
        %v876 = vpop.f32.mrf.mxu0
        %v877 = vadd.f32 %v494, %v876
        %v878 = vpop.f32.mrf.mxu0
        %v879 = vadd.f32 %v494, %v878
        %880 = vmatmul.bf16.gmra.mxu0 %v567
        %v881 = vpop.f32.mrf.mxu0
        %v882 = vadd.f32 %v494, %v881
        %v883 = vpop.f32.mrf.mxu0
        %v884 = vadd.f32 %v494, %v883
        %885 = vmatmul.bf16.gmra.mxu0 %v568
        %v886 = vpop.f32.mrf.mxu0
        %v887 = vadd.f32 %v494, %v886
        %v888 = vpop.f32.mrf.mxu0
        %v889 = vadd.f32 %v494, %v888
        %890 = vmatmul.bf16.gmra.mxu0 %v569
        %v891 = vpop.f32.mrf.mxu0
        %v892 = vadd.f32 %v494, %v891
        %v893 = vpop.f32.mrf.mxu0
        %v894 = vadd.f32 %v494, %v893
        %895 = vmatmul.bf16.gmra.mxu0 %v570
        %v896 = vpop.f32.mrf.mxu0
        %v897 = vadd.f32 %v494, %v896
        %v898 = vpop.f32.mrf.mxu0
        %v899 = vadd.f32 %v494, %v898
        %900 = vmatmul.bf16.gmra.mxu0 %v571
        %v901 = vpop.f32.mrf.mxu0
        %v902 = vadd.f32 %v494, %v901
        %v903 = vpop.f32.mrf.mxu0
        %v904 = vadd.f32 %v494, %v903
        %905 = vmatmul.bf16.gmra.mxu0 %v572
        %v906 = vpop.f32.mrf.mxu0
        %v907 = vadd.f32 %v494, %v906
        %v908 = vpop.f32.mrf.mxu0
        %v909 = vadd.f32 %v494, %v908
        %910 = vmatmul.bf16.gmra.mxu0 %v573
        %v911 = vpop.f32.mrf.mxu0
        %v912 = vadd.f32 %v494, %v911
        %v913 = vpop.f32.mrf.mxu0
        %v914 = vadd.f32 %v494, %v913
        %915 = vmatmul.bf16.gmra.mxu0 %v574
        %v916 = vpop.f32.mrf.mxu0
        %v917 = vadd.f32 %v494, %v916
        %v918 = vpop.f32.mrf.mxu0
        %v919 = vadd.f32 %v494, %v918
        %920 = vmatmul.bf16.gmra.mxu0 %v575
        %v921 = vpop.f32.mrf.mxu0
        %v922 = vadd.f32 %v494, %v921
        %v923 = vpop.f32.mrf.mxu0
        %v924 = vadd.f32 %v494, %v923
        %925 = vmatmul.bf16.gmra.mxu0 %v576
        %v926 = vpop.f32.mrf.mxu0
        %v927 = vadd.f32 %v494, %v926
        %v928 = vpop.f32.mrf.mxu0
        %v929 = vadd.f32 %v494, %v928
        %930 = vdwg.mxu0
        %931 = vmatpush.bf16.msra.mxu0 %v719
        %932 = vmatpush.bf16.msra.mxu0 %v715
        %933 = vmatpush.bf16.msra.mxu0 %v711
        %934 = vmatpush.bf16.msra.mxu0 %v707
        %935 = vmatpush.bf16.msra.mxu0 %v703
        %936 = vmatpush.bf16.msra.mxu0 %v699
        %937 = vmatpush.bf16.msra.mxu0 %v695
        %938 = vmatpush.bf16.msra.mxu0 %v691
        %939 = vmatmul.bf16.gmra.mxu0 %v561
        %v940 = vpop.f32.mrf.mxu0
        %v941 = vadd.f32 %v495, %v940
        %v942 = vpop.f32.mrf.mxu0
        %v943 = vadd.f32 %v495, %v942
        %944 = vmatmul.bf16.gmra.mxu0 %v562
        %v945 = vpop.f32.mrf.mxu0
        %v946 = vadd.f32 %v495, %v945
        %v947 = vpop.f32.mrf.mxu0
        %v948 = vadd.f32 %v495, %v947
        %949 = vmatmul.bf16.gmra.mxu0 %v563
        %v950 = vpop.f32.mrf.mxu0
        %v951 = vadd.f32 %v495, %v950
        %v952 = vpop.f32.mrf.mxu0
        %v953 = vadd.f32 %v495, %v952
        %954 = vmatmul.bf16.gmra.mxu0 %v564
        %v955 = vpop.f32.mrf.mxu0
        %v956 = vadd.f32 %v495, %v955
        %v957 = vpop.f32.mrf.mxu0
        %v958 = vadd.f32 %v495, %v957
        %959 = vmatmul.bf16.gmra.mxu0 %v565
        %v960 = vpop.f32.mrf.mxu0
        %v961 = vadd.f32 %v495, %v960
        %v962 = vpop.f32.mrf.mxu0
        %v963 = vadd.f32 %v495, %v962
        %964 = vmatmul.bf16.gmra.mxu0 %v566
        %v965 = vpop.f32.mrf.mxu0
        %v966 = vadd.f32 %v495, %v965
        %v967 = vpop.f32.mrf.mxu0
        %v968 = vadd.f32 %v495, %v967
        %969 = vmatmul.bf16.gmra.mxu0 %v567
        %v970 = vpop.f32.mrf.mxu0
        %v971 = vadd.f32 %v495, %v970
        %v972 = vpop.f32.mrf.mxu0
        %v973 = vadd.f32 %v495, %v972
        %974 = vmatmul.bf16.gmra.mxu0 %v568
        %v975 = vpop.f32.mrf.mxu0
        %v976 = vadd.f32 %v495, %v975
        %v977 = vpop.f32.mrf.mxu0
        %v978 = vadd.f32 %v495, %v977
        %979 = vmatmul.bf16.gmra.mxu0 %v569
        %v980 = vpop.f32.mrf.mxu0
        %v981 = vadd.f32 %v495, %v980
        %v982 = vpop.f32.mrf.mxu0
        %v983 = vadd.f32 %v495, %v982
        %984 = vmatmul.bf16.gmra.mxu0 %v570
        %v985 = vpop.f32.mrf.mxu0
        %v986 = vadd.f32 %v495, %v985
        %v987 = vpop.f32.mrf.mxu0
        %v988 = vadd.f32 %v495, %v987
        %989 = vmatmul.bf16.gmra.mxu0 %v571
        %v990 = vpop.f32.mrf.mxu0
        %v991 = vadd.f32 %v495, %v990
        %v992 = vpop.f32.mrf.mxu0
        %v993 = vadd.f32 %v495, %v992
        %994 = vmatmul.bf16.gmra.mxu0 %v572
        %v995 = vpop.f32.mrf.mxu0
        %v996 = vadd.f32 %v495, %v995
        %v997 = vpop.f32.mrf.mxu0
        %v998 = vadd.f32 %v495, %v997
        %999 = vmatmul.bf16.gmra.mxu0 %v573
        %v1000 = vpop.f32.mrf.mxu0
        %v1001 = vadd.f32 %v495, %v1000
        %v1002 = vpop.f32.mrf.mxu0
        %v1003 = vadd.f32 %v495, %v1002
        %1004 = vmatmul.bf16.gmra.mxu0 %v574
        %v1005 = vpop.f32.mrf.mxu0
        %v1006 = vadd.f32 %v495, %v1005
        %v1007 = vpop.f32.mrf.mxu0
        %v1008 = vadd.f32 %v495, %v1007
        %1009 = vmatmul.bf16.gmra.mxu0 %v575
        %v1010 = vpop.f32.mrf.mxu0
        %v1011 = vadd.f32 %v495, %v1010
        %v1012 = vpop.f32.mrf.mxu0
        %v1013 = vadd.f32 %v495, %v1012
        %1014 = vmatmul.bf16.gmra.mxu0 %v576
        %v1015 = vpop.f32.mrf.mxu0
        %v1016 = vadd.f32 %v495, %v1015
        %v1017 = vpop.f32.mrf.mxu0
        %v1018 = vadd.f32 %v495, %v1017
        %1019 = vdwg.mxu0
        %1020 = vmatpush.bf16.msra.mxu0 %v720
        %1021 = vmatpush.bf16.msra.mxu0 %v716
        %1022 = vmatpush.bf16.msra.mxu0 %v712
        %1023 = vmatpush.bf16.msra.mxu0 %v708
        %1024 = vmatpush.bf16.msra.mxu0 %v704
        %1025 = vmatpush.bf16.msra.mxu0 %v700
        %1026 = vmatpush.bf16.msra.mxu0 %v696
        %1027 = vmatpush.bf16.msra.mxu0 %v692
        %1028 = vmatmul.bf16.gmra.mxu0 %v561
        %v1029 = vpop.f32.mrf.mxu0
        %v1030 = vadd.f32 %v496, %v1029
        %v1031 = vpop.f32.mrf.mxu0
        %v1032 = vadd.f32 %v496, %v1031
        %1033 = vmatmul.bf16.gmra.mxu0 %v562
        %v1034 = vpop.f32.mrf.mxu0
        %v1035 = vadd.f32 %v496, %v1034
        %v1036 = vpop.f32.mrf.mxu0
        %v1037 = vadd.f32 %v496, %v1036
        %1038 = vmatmul.bf16.gmra.mxu0 %v563
        %v1039 = vpop.f32.mrf.mxu0
        %v1040 = vadd.f32 %v496, %v1039
        %v1041 = vpop.f32.mrf.mxu0
        %v1042 = vadd.f32 %v496, %v1041
        %1043 = vmatmul.bf16.gmra.mxu0 %v564
        %v1044 = vpop.f32.mrf.mxu0
        %v1045 = vadd.f32 %v496, %v1044
        %v1046 = vpop.f32.mrf.mxu0
        %v1047 = vadd.f32 %v496, %v1046
        %1048 = vmatmul.bf16.gmra.mxu0 %v565
        %v1049 = vpop.f32.mrf.mxu0
        %v1050 = vadd.f32 %v496, %v1049
        %v1051 = vpop.f32.mrf.mxu0
        %v1052 = vadd.f32 %v496, %v1051
        %1053 = vmatmul.bf16.gmra.mxu0 %v566
        %v1054 = vpop.f32.mrf.mxu0
        %v1055 = vadd.f32 %v496, %v1054
        %v1056 = vpop.f32.mrf.mxu0
        %v1057 = vadd.f32 %v496, %v1056
        %1058 = vmatmul.bf16.gmra.mxu0 %v567
        %v1059 = vpop.f32.mrf.mxu0
        %v1060 = vadd.f32 %v496, %v1059
        %v1061 = vpop.f32.mrf.mxu0
        %v1062 = vadd.f32 %v496, %v1061
        %1063 = vmatmul.bf16.gmra.mxu0 %v568
        %v1064 = vpop.f32.mrf.mxu0
        %v1065 = vadd.f32 %v496, %v1064
        %v1066 = vpop.f32.mrf.mxu0
        %v1067 = vadd.f32 %v496, %v1066
        %1068 = vmatmul.bf16.gmra.mxu0 %v569
        %v1069 = vpop.f32.mrf.mxu0
        %v1070 = vadd.f32 %v496, %v1069
        %v1071 = vpop.f32.mrf.mxu0
        %v1072 = vadd.f32 %v496, %v1071
        %1073 = vmatmul.bf16.gmra.mxu0 %v570
        %v1074 = vpop.f32.mrf.mxu0
        %v1075 = vadd.f32 %v496, %v1074
        %v1076 = vpop.f32.mrf.mxu0
        %v1077 = vadd.f32 %v496, %v1076
        %1078 = vmatmul.bf16.gmra.mxu0 %v571
        %v1079 = vpop.f32.mrf.mxu0
        %v1080 = vadd.f32 %v496, %v1079
        %v1081 = vpop.f32.mrf.mxu0
        %v1082 = vadd.f32 %v496, %v1081
        %1083 = vmatmul.bf16.gmra.mxu0 %v572
        %v1084 = vpop.f32.mrf.mxu0
        %v1085 = vadd.f32 %v496, %v1084
        %v1086 = vpop.f32.mrf.mxu0
        %v1087 = vadd.f32 %v496, %v1086
        %1088 = vmatmul.bf16.gmra.mxu0 %v573
        %v1089 = vpop.f32.mrf.mxu0
        %v1090 = vadd.f32 %v496, %v1089
        %v1091 = vpop.f32.mrf.mxu0
        %v1092 = vadd.f32 %v496, %v1091
        %1093 = vmatmul.bf16.gmra.mxu0 %v574
        %v1094 = vpop.f32.mrf.mxu0
        %v1095 = vadd.f32 %v496, %v1094
        %v1096 = vpop.f32.mrf.mxu0
        %v1097 = vadd.f32 %v496, %v1096
        %1098 = vmatmul.bf16.gmra.mxu0 %v575
        %v1099 = vpop.f32.mrf.mxu0
        %v1100 = vadd.f32 %v496, %v1099
        %v1101 = vpop.f32.mrf.mxu0
        %v1102 = vadd.f32 %v496, %v1101
        %1103 = vmatmul.bf16.gmra.mxu0 %v576
        %v1104 = vpop.f32.mrf.mxu0
        %v1105 = vadd.f32 %v496, %v1104
        %v1106 = vpop.f32.mrf.mxu0
        %v1107 = vadd.f32 %v496, %v1106
        %1108 = vdwg.mxu0
        %v1109 = vxor.u32 %v763, 2147483648
        %v1110 = vxor.u32 %v852, 2147483648
        %v1111 = vxor.u32 %v765, 2147483648
        %v1112 = vxor.u32 %v854, 2147483648
        %v1113 = vxor.u32 %v768, 2147483648
        %v1114 = vxor.u32 %v857, 2147483648
        %v1115 = vxor.u32 %v770, 2147483648
        %v1116 = vxor.u32 %v859, 2147483648
        %v1117 = vxor.u32 %v773, 2147483648
        %v1118 = vxor.u32 %v862, 2147483648
        %v1119 = vxor.u32 %v775, 2147483648
        %v1120 = vxor.u32 %v864, 2147483648
        %v1121 = vxor.u32 %v778, 2147483648
        %v1122 = vxor.u32 %v867, 2147483648
        %v1123 = vxor.u32 %v780, 2147483648
        %v1124 = vxor.u32 %v869, 2147483648
        %v1125 = vxor.u32 %v783, 2147483648
        %v1126 = vxor.u32 %v872, 2147483648
        %v1127 = vxor.u32 %v785, 2147483648
        %v1128 = vxor.u32 %v874, 2147483648
        %v1129 = vxor.u32 %v788, 2147483648
        %v1130 = vxor.u32 %v877, 2147483648
        %v1131 = vxor.u32 %v790, 2147483648
        %v1132 = vxor.u32 %v879, 2147483648
        %v1133 = vxor.u32 %v793, 2147483648
        %v1134 = vxor.u32 %v882, 2147483648
        %v1135 = vxor.u32 %v795, 2147483648
        %v1136 = vxor.u32 %v884, 2147483648
        %v1137 = vxor.u32 %v798, 2147483648
        %v1138 = vxor.u32 %v887, 2147483648
        %v1139 = vxor.u32 %v800, 2147483648
        %v1140 = vxor.u32 %v889, 2147483648
        %v1141 = vxor.u32 %v803, 2147483648
        %v1142 = vxor.u32 %v892, 2147483648
        %v1143 = vxor.u32 %v805, 2147483648
        %v1144 = vxor.u32 %v894, 2147483648
        %v1145 = vxor.u32 %v808, 2147483648
        %v1146 = vxor.u32 %v897, 2147483648
        %v1147 = vxor.u32 %v810, 2147483648
        %v1148 = vxor.u32 %v899, 2147483648
        %v1149 = vxor.u32 %v813, 2147483648
        %v1150 = vxor.u32 %v902, 2147483648
        %v1151 = vxor.u32 %v815, 2147483648
        %v1152 = vxor.u32 %v904, 2147483648
        %v1153 = vxor.u32 %v818, 2147483648
        %v1154 = vxor.u32 %v907, 2147483648
        %v1155 = vxor.u32 %v820, 2147483648
        %v1156 = vxor.u32 %v909, 2147483648
        %v1157 = vxor.u32 %v823, 2147483648
        %v1158 = vxor.u32 %v912, 2147483648
        %v1159 = vxor.u32 %v825, 2147483648
        %v1160 = vxor.u32 %v914, 2147483648
        %v1161 = vxor.u32 %v828, 2147483648
        %v1162 = vxor.u32 %v917, 2147483648
        %v1163 = vxor.u32 %v830, 2147483648
        %v1164 = vxor.u32 %v919, 2147483648
        %v1165 = vxor.u32 %v833, 2147483648
        %v1166 = vxor.u32 %v922, 2147483648
        %v1167 = vxor.u32 %v835, 2147483648
        %v1168 = vxor.u32 %v924, 2147483648
        %v1169 = vxor.u32 %v838, 2147483648
        %v1170 = vxor.u32 %v927, 2147483648
        %v1171 = vxor.u32 %v840, 2147483648
        %v1172 = vxor.u32 %v929, 2147483648
        %v1173 = vmul.f32 %v1109, 1.442695
        %v1174 = vpow.pop %v1173
        %v1175 = vmul.f32 %v1110, 1.442695
        %v1176 = vpow.pop %v1175
        %v1177 = vmul.f32 %v1111, 1.442695
        %v1178 = vpow.pop %v1177
        %v1179 = vmul.f32 %v1112, 1.442695
        %v1180 = vpow.pop %v1179
        %v1181 = vmul.f32 %v1113, 1.442695
        %v1182 = vpow.pop %v1181
        %v1183 = vmul.f32 %v1114, 1.442695
        %v1184 = vpow.pop %v1183
        %v1185 = vmul.f32 %v1115, 1.442695
        %v1186 = vpow.pop %v1185
        %v1187 = vmul.f32 %v1116, 1.442695
        %v1188 = vpow.pop %v1187
        %v1189 = vmul.f32 %v1117, 1.442695
        %v1190 = vpow.pop %v1189
        %v1191 = vmul.f32 %v1118, 1.442695
        %v1192 = vpow.pop %v1191
        %v1193 = vmul.f32 %v1119, 1.442695
        %v1194 = vpow.pop %v1193
        %v1195 = vmul.f32 %v1120, 1.442695
        %v1196 = vpow.pop %v1195
        %v1197 = vmul.f32 %v1121, 1.442695
        %v1198 = vpow.pop %v1197
        %v1199 = vmul.f32 %v1122, 1.442695
        %v1200 = vpow.pop %v1199
        %v1201 = vmul.f32 %v1123, 1.442695
        %v1202 = vpow.pop %v1201
        %v1203 = vmul.f32 %v1124, 1.442695
        %v1204 = vpow.pop %v1203
        %v1205 = vmul.f32 %v1125, 1.442695
        %v1206 = vpow.pop %v1205
        %v1207 = vmul.f32 %v1126, 1.442695
        %v1208 = vpow.pop %v1207
        %v1209 = vmul.f32 %v1127, 1.442695
        %v1210 = vpow.pop %v1209
        %v1211 = vmul.f32 %v1128, 1.442695
        %v1212 = vpow.pop %v1211
        %v1213 = vmul.f32 %v1129, 1.442695
        %v1214 = vpow.pop %v1213
        %v1215 = vmul.f32 %v1130, 1.442695
        %v1216 = vpow.pop %v1215
        %v1217 = vmul.f32 %v1131, 1.442695
        %v1218 = vpow.pop %v1217
        %v1219 = vmul.f32 %v1132, 1.442695
        %v1220 = vpow.pop %v1219
        %v1221 = vmul.f32 %v1133, 1.442695
        %v1222 = vpow.pop %v1221
        %v1223 = vmul.f32 %v1134, 1.442695
        %v1224 = vpow.pop %v1223
        %v1225 = vmul.f32 %v1135, 1.442695
        %v1226 = vpow.pop %v1225
        %v1227 = vmul.f32 %v1136, 1.442695
        %v1228 = vpow.pop %v1227
        %v1229 = vmul.f32 %v1137, 1.442695
        %v1230 = vpow.pop %v1229
        %v1231 = vmul.f32 %v1138, 1.442695
        %v1232 = vpow.pop %v1231
        %v1233 = vmul.f32 %v1139, 1.442695
        %v1234 = vpow.pop %v1233
        %v1235 = vmul.f32 %v1140, 1.442695
        %v1236 = vpow.pop %v1235
        %v1237 = vmul.f32 %v1141, 1.442695
        %v1238 = vpow.pop %v1237
        %v1239 = vmul.f32 %v1142, 1.442695
        %v1240 = vpow.pop %v1239
        %v1241 = vmul.f32 %v1143, 1.442695
        %v1242 = vpow.pop %v1241
        %v1243 = vmul.f32 %v1144, 1.442695
        %v1244 = vpow.pop %v1243
        %v1245 = vmul.f32 %v1145, 1.442695
        %v1246 = vpow.pop %v1245
        %v1247 = vmul.f32 %v1146, 1.442695
        %v1248 = vpow.pop %v1247
        %v1249 = vmul.f32 %v1147, 1.442695
        %v1250 = vpow.pop %v1249
        %v1251 = vmul.f32 %v1148, 1.442695
        %v1252 = vpow.pop %v1251
        %v1253 = vmul.f32 %v1149, 1.442695
        %v1254 = vpow.pop %v1253
        %v1255 = vmul.f32 %v1150, 1.442695
        %v1256 = vpow.pop %v1255
        %v1257 = vmul.f32 %v1151, 1.442695
        %v1258 = vpow.pop %v1257
        %v1259 = vmul.f32 %v1152, 1.442695
        %v1260 = vpow.pop %v1259
        %v1261 = vmul.f32 %v1153, 1.442695
        %v1262 = vpow.pop %v1261
        %v1263 = vmul.f32 %v1154, 1.442695
        %v1264 = vpow.pop %v1263
        %v1265 = vmul.f32 %v1155, 1.442695
        %v1266 = vpow.pop %v1265
        %v1267 = vmul.f32 %v1156, 1.442695
        %v1268 = vpow.pop %v1267
        %v1269 = vmul.f32 %v1157, 1.442695
        %v1270 = vpow.pop %v1269
        %v1271 = vmul.f32 %v1158, 1.442695
        %v1272 = vpow.pop %v1271
        %v1273 = vmul.f32 %v1159, 1.442695
        %v1274 = vpow.pop %v1273
        %v1275 = vmul.f32 %v1160, 1.442695
        %v1276 = vpow.pop %v1275
        %v1277 = vmul.f32 %v1161, 1.442695
        %v1278 = vpow.pop %v1277
        %v1279 = vmul.f32 %v1162, 1.442695
        %v1280 = vpow.pop %v1279
        %v1281 = vmul.f32 %v1163, 1.442695
        %v1282 = vpow.pop %v1281
        %v1283 = vmul.f32 %v1164, 1.442695
        %v1284 = vpow.pop %v1283
        %v1285 = vmul.f32 %v1165, 1.442695
        %v1286 = vpow.pop %v1285
        %v1287 = vmul.f32 %v1166, 1.442695
        %v1288 = vpow.pop %v1287
        %v1289 = vmul.f32 %v1167, 1.442695
        %v1290 = vpow.pop %v1289
        %v1291 = vmul.f32 %v1168, 1.442695
        %v1292 = vpow.pop %v1291
        %v1293 = vmul.f32 %v1169, 1.442695
        %v1294 = vpow.pop %v1293
        %v1295 = vmul.f32 %v1170, 1.442695
        %v1296 = vpow.pop %v1295
        %v1297 = vmul.f32 %v1171, 1.442695
        %v1298 = vpow.pop %v1297
        %v1299 = vmul.f32 %v1172, 1.442695
        %v1300 = vpow.pop %v1299
        %v1301 = vadd.f32 %v1174, 1.0
        %v1302 = vadd.f32 %v1176, 1.0
        %v1303 = vadd.f32 %v1178, 1.0
        %v1304 = vadd.f32 %v1180, 1.0
        %v1305 = vadd.f32 %v1182, 1.0
        %v1306 = vadd.f32 %v1184, 1.0
        %v1307 = vadd.f32 %v1186, 1.0
        %v1308 = vadd.f32 %v1188, 1.0
        %v1309 = vadd.f32 %v1190, 1.0
        %v1310 = vadd.f32 %v1192, 1.0
        %v1311 = vadd.f32 %v1194, 1.0
        %v1312 = vadd.f32 %v1196, 1.0
        %v1313 = vadd.f32 %v1198, 1.0
        %v1314 = vadd.f32 %v1200, 1.0
        %v1315 = vadd.f32 %v1202, 1.0
        %v1316 = vadd.f32 %v1204, 1.0
        %v1317 = vadd.f32 %v1206, 1.0
        %v1318 = vadd.f32 %v1208, 1.0
        %v1319 = vadd.f32 %v1210, 1.0
        %v1320 = vadd.f32 %v1212, 1.0
        %v1321 = vadd.f32 %v1214, 1.0
        %v1322 = vadd.f32 %v1216, 1.0
        %v1323 = vadd.f32 %v1218, 1.0
        %v1324 = vadd.f32 %v1220, 1.0
        %v1325 = vadd.f32 %v1222, 1.0
        %v1326 = vadd.f32 %v1224, 1.0
        %v1327 = vadd.f32 %v1226, 1.0
        %v1328 = vadd.f32 %v1228, 1.0
        %v1329 = vadd.f32 %v1230, 1.0
        %v1330 = vadd.f32 %v1232, 1.0
        %v1331 = vadd.f32 %v1234, 1.0
        %v1332 = vadd.f32 %v1236, 1.0
        %v1333 = vadd.f32 %v1238, 1.0
        %v1334 = vadd.f32 %v1240, 1.0
        %v1335 = vadd.f32 %v1242, 1.0
        %v1336 = vadd.f32 %v1244, 1.0
        %v1337 = vadd.f32 %v1246, 1.0
        %v1338 = vadd.f32 %v1248, 1.0
        %v1339 = vadd.f32 %v1250, 1.0
        %v1340 = vadd.f32 %v1252, 1.0
        %v1341 = vadd.f32 %v1254, 1.0
        %v1342 = vadd.f32 %v1256, 1.0
        %v1343 = vadd.f32 %v1258, 1.0
        %v1344 = vadd.f32 %v1260, 1.0
        %v1345 = vadd.f32 %v1262, 1.0
        %v1346 = vadd.f32 %v1264, 1.0
        %v1347 = vadd.f32 %v1266, 1.0
        %v1348 = vadd.f32 %v1268, 1.0
        %v1349 = vadd.f32 %v1270, 1.0
        %v1350 = vadd.f32 %v1272, 1.0
        %v1351 = vadd.f32 %v1274, 1.0
        %v1352 = vadd.f32 %v1276, 1.0
        %v1353 = vadd.f32 %v1278, 1.0
        %v1354 = vadd.f32 %v1280, 1.0
        %v1355 = vadd.f32 %v1282, 1.0
        %v1356 = vadd.f32 %v1284, 1.0
        %v1357 = vadd.f32 %v1286, 1.0
        %v1358 = vadd.f32 %v1288, 1.0
        %v1359 = vadd.f32 %v1290, 1.0
        %v1360 = vadd.f32 %v1292, 1.0
        %v1361 = vadd.f32 %v1294, 1.0
        %v1362 = vadd.f32 %v1296, 1.0
        %v1363 = vadd.f32 %v1298, 1.0
        %v1364 = vadd.f32 %v1300, 1.0
        %v1365 = vrcp.pop %v1301
        %v1366 = vmul.f32 %v1301, %v1365
        %v1367 = vsub.f32 1.0, %v1366
        %v1368 = vmul.f32 %v1365, %v1367
        %v1369 = vadd.f32 %v1365, %v1368
        %vm1370 = vweird.f32 %v1301
        %vm1371 = vweird.f32 %v1365
        %vm1372 = vmor %vm1370, %vm1371
        %v1373 = vsel %vm1372, %v1365, %v1369
        %v1374 = vand.u32 2147483647, %v1301
        %vm1375 = vcmp.eq.f32.partialorder %v1374, 8.507059e+37
        %v1376 = vand.u32 %v1301, 2147483648
        %v1377 = vor.u32 1.1754944e-38, %v1376
        %v1378 = vsel %vm1375, %v1377, %v1373
        %v1379 = vmul.f32 1.0, %v1378
        %v1380 = vrcp.pop %v1302
        %v1381 = vmul.f32 %v1302, %v1380
        %v1382 = vsub.f32 1.0, %v1381
        %v1383 = vmul.f32 %v1380, %v1382
        %v1384 = vadd.f32 %v1380, %v1383
        %vm1385 = vweird.f32 %v1302
        %vm1386 = vweird.f32 %v1380
        %vm1387 = vmor %vm1385, %vm1386
        %v1388 = vsel %vm1387, %v1380, %v1384
        %v1389 = vand.u32 2147483647, %v1302
        %vm1390 = vcmp.eq.f32.partialorder %v1389, 8.507059e+37
        %v1391 = vand.u32 %v1302, 2147483648
        %v1392 = vor.u32 1.1754944e-38, %v1391
        %v1393 = vsel %vm1390, %v1392, %v1388
        %v1394 = vmul.f32 1.0, %v1393
        %v1395 = vrcp.pop %v1303
        %v1396 = vmul.f32 %v1303, %v1395
        %v1397 = vsub.f32 1.0, %v1396
        %v1398 = vmul.f32 %v1395, %v1397
        %v1399 = vadd.f32 %v1395, %v1398
        %vm1400 = vweird.f32 %v1303
        %vm1401 = vweird.f32 %v1395
        %vm1402 = vmor %vm1400, %vm1401
        %v1403 = vsel %vm1402, %v1395, %v1399
        %v1404 = vand.u32 2147483647, %v1303
        %vm1405 = vcmp.eq.f32.partialorder %v1404, 8.507059e+37
        %v1406 = vand.u32 %v1303, 2147483648
        %v1407 = vor.u32 1.1754944e-38, %v1406
        %v1408 = vsel %vm1405, %v1407, %v1403
        %v1409 = vmul.f32 1.0, %v1408
        %v1410 = vrcp.pop %v1304
        %v1411 = vmul.f32 %v1304, %v1410
        %v1412 = vsub.f32 1.0, %v1411
        %v1413 = vmul.f32 %v1410, %v1412
        %v1414 = vadd.f32 %v1410, %v1413
        %vm1415 = vweird.f32 %v1304
        %vm1416 = vweird.f32 %v1410
        %vm1417 = vmor %vm1415, %vm1416
        %v1418 = vsel %vm1417, %v1410, %v1414
        %v1419 = vand.u32 2147483647, %v1304
        %vm1420 = vcmp.eq.f32.partialorder %v1419, 8.507059e+37
        %v1421 = vand.u32 %v1304, 2147483648
        %v1422 = vor.u32 1.1754944e-38, %v1421
        %v1423 = vsel %vm1420, %v1422, %v1418
        %v1424 = vmul.f32 1.0, %v1423
        %v1425 = vrcp.pop %v1305
        %v1426 = vmul.f32 %v1305, %v1425
        %v1427 = vsub.f32 1.0, %v1426
        %v1428 = vmul.f32 %v1425, %v1427
        %v1429 = vadd.f32 %v1425, %v1428
        %vm1430 = vweird.f32 %v1305
        %vm1431 = vweird.f32 %v1425
        %vm1432 = vmor %vm1430, %vm1431
        %v1433 = vsel %vm1432, %v1425, %v1429
        %v1434 = vand.u32 2147483647, %v1305
        %vm1435 = vcmp.eq.f32.partialorder %v1434, 8.507059e+37
        %v1436 = vand.u32 %v1305, 2147483648
        %v1437 = vor.u32 1.1754944e-38, %v1436
        %v1438 = vsel %vm1435, %v1437, %v1433
        %v1439 = vmul.f32 1.0, %v1438
        %v1440 = vrcp.pop %v1306
        %v1441 = vmul.f32 %v1306, %v1440
        %v1442 = vsub.f32 1.0, %v1441
        %v1443 = vmul.f32 %v1440, %v1442
        %v1444 = vadd.f32 %v1440, %v1443
        %vm1445 = vweird.f32 %v1306
        %vm1446 = vweird.f32 %v1440
        %vm1447 = vmor %vm1445, %vm1446
        %v1448 = vsel %vm1447, %v1440, %v1444
        %v1449 = vand.u32 2147483647, %v1306
        %vm1450 = vcmp.eq.f32.partialorder %v1449, 8.507059e+37
        %v1451 = vand.u32 %v1306, 2147483648
        %v1452 = vor.u32 1.1754944e-38, %v1451
        %v1453 = vsel %vm1450, %v1452, %v1448
        %v1454 = vmul.f32 1.0, %v1453
        %v1455 = vrcp.pop %v1307
        %v1456 = vmul.f32 %v1307, %v1455
        %v1457 = vsub.f32 1.0, %v1456
        %v1458 = vmul.f32 %v1455, %v1457
        %v1459 = vadd.f32 %v1455, %v1458
        %vm1460 = vweird.f32 %v1307
        %vm1461 = vweird.f32 %v1455
        %vm1462 = vmor %vm1460, %vm1461
        %v1463 = vsel %vm1462, %v1455, %v1459
        %v1464 = vand.u32 2147483647, %v1307
        %vm1465 = vcmp.eq.f32.partialorder %v1464, 8.507059e+37
        %v1466 = vand.u32 %v1307, 2147483648
        %v1467 = vor.u32 1.1754944e-38, %v1466
        %v1468 = vsel %vm1465, %v1467, %v1463
        %v1469 = vmul.f32 1.0, %v1468
        %v1470 = vrcp.pop %v1308
        %v1471 = vmul.f32 %v1308, %v1470
        %v1472 = vsub.f32 1.0, %v1471
        %v1473 = vmul.f32 %v1470, %v1472
        %v1474 = vadd.f32 %v1470, %v1473
        %vm1475 = vweird.f32 %v1308
        %vm1476 = vweird.f32 %v1470
        %vm1477 = vmor %vm1475, %vm1476
        %v1478 = vsel %vm1477, %v1470, %v1474
        %v1479 = vand.u32 2147483647, %v1308
        %vm1480 = vcmp.eq.f32.partialorder %v1479, 8.507059e+37
        %v1481 = vand.u32 %v1308, 2147483648
        %v1482 = vor.u32 1.1754944e-38, %v1481
        %v1483 = vsel %vm1480, %v1482, %v1478
        %v1484 = vmul.f32 1.0, %v1483
        %v1485 = vrcp.pop %v1309
        %v1486 = vmul.f32 %v1309, %v1485
        %v1487 = vsub.f32 1.0, %v1486
        %v1488 = vmul.f32 %v1485, %v1487
        %v1489 = vadd.f32 %v1485, %v1488
        %vm1490 = vweird.f32 %v1309
        %vm1491 = vweird.f32 %v1485
        %vm1492 = vmor %vm1490, %vm1491
        %v1493 = vsel %vm1492, %v1485, %v1489
        %v1494 = vand.u32 2147483647, %v1309
        %vm1495 = vcmp.eq.f32.partialorder %v1494, 8.507059e+37
        %v1496 = vand.u32 %v1309, 2147483648
        %v1497 = vor.u32 1.1754944e-38, %v1496
        %v1498 = vsel %vm1495, %v1497, %v1493
        %v1499 = vmul.f32 1.0, %v1498
        %v1500 = vrcp.pop %v1310
        %v1501 = vmul.f32 %v1310, %v1500
        %v1502 = vsub.f32 1.0, %v1501
        %v1503 = vmul.f32 %v1500, %v1502
        %v1504 = vadd.f32 %v1500, %v1503
        %vm1505 = vweird.f32 %v1310
        %vm1506 = vweird.f32 %v1500
        %vm1507 = vmor %vm1505, %vm1506
        %v1508 = vsel %vm1507, %v1500, %v1504
        %v1509 = vand.u32 2147483647, %v1310
        %vm1510 = vcmp.eq.f32.partialorder %v1509, 8.507059e+37
        %v1511 = vand.u32 %v1310, 2147483648
        %v1512 = vor.u32 1.1754944e-38, %v1511
        %v1513 = vsel %vm1510, %v1512, %v1508
        %v1514 = vmul.f32 1.0, %v1513
        %v1515 = vrcp.pop %v1311
        %v1516 = vmul.f32 %v1311, %v1515
        %v1517 = vsub.f32 1.0, %v1516
        %v1518 = vmul.f32 %v1515, %v1517
        %v1519 = vadd.f32 %v1515, %v1518
        %vm1520 = vweird.f32 %v1311
        %vm1521 = vweird.f32 %v1515
        %vm1522 = vmor %vm1520, %vm1521
        %v1523 = vsel %vm1522, %v1515, %v1519
        %v1524 = vand.u32 2147483647, %v1311
        %vm1525 = vcmp.eq.f32.partialorder %v1524, 8.507059e+37
        %v1526 = vand.u32 %v1311, 2147483648
        %v1527 = vor.u32 1.1754944e-38, %v1526
        %v1528 = vsel %vm1525, %v1527, %v1523
        %v1529 = vmul.f32 1.0, %v1528
        %v1530 = vrcp.pop %v1312
        %v1531 = vmul.f32 %v1312, %v1530
        %v1532 = vsub.f32 1.0, %v1531
        %v1533 = vmul.f32 %v1530, %v1532
        %v1534 = vadd.f32 %v1530, %v1533
        %vm1535 = vweird.f32 %v1312
        %vm1536 = vweird.f32 %v1530
        %vm1537 = vmor %vm1535, %vm1536
        %v1538 = vsel %vm1537, %v1530, %v1534
        %v1539 = vand.u32 2147483647, %v1312
        %vm1540 = vcmp.eq.f32.partialorder %v1539, 8.507059e+37
        %v1541 = vand.u32 %v1312, 2147483648
        %v1542 = vor.u32 1.1754944e-38, %v1541
        %v1543 = vsel %vm1540, %v1542, %v1538
        %v1544 = vmul.f32 1.0, %v1543
        %v1545 = vrcp.pop %v1313
        %v1546 = vmul.f32 %v1313, %v1545
        %v1547 = vsub.f32 1.0, %v1546
        %v1548 = vmul.f32 %v1545, %v1547
        %v1549 = vadd.f32 %v1545, %v1548
        %vm1550 = vweird.f32 %v1313
        %vm1551 = vweird.f32 %v1545
        %vm1552 = vmor %vm1550, %vm1551
        %v1553 = vsel %vm1552, %v1545, %v1549
        %v1554 = vand.u32 2147483647, %v1313
        %vm1555 = vcmp.eq.f32.partialorder %v1554, 8.507059e+37
        %v1556 = vand.u32 %v1313, 2147483648
        %v1557 = vor.u32 1.1754944e-38, %v1556
        %v1558 = vsel %vm1555, %v1557, %v1553
        %v1559 = vmul.f32 1.0, %v1558
        %v1560 = vrcp.pop %v1314
        %v1561 = vmul.f32 %v1314, %v1560
        %v1562 = vsub.f32 1.0, %v1561
        %v1563 = vmul.f32 %v1560, %v1562
        %v1564 = vadd.f32 %v1560, %v1563
        %vm1565 = vweird.f32 %v1314
        %vm1566 = vweird.f32 %v1560
        %vm1567 = vmor %vm1565, %vm1566
        %v1568 = vsel %vm1567, %v1560, %v1564
        %v1569 = vand.u32 2147483647, %v1314
        %vm1570 = vcmp.eq.f32.partialorder %v1569, 8.507059e+37
        %v1571 = vand.u32 %v1314, 2147483648
        %v1572 = vor.u32 1.1754944e-38, %v1571
        %v1573 = vsel %vm1570, %v1572, %v1568
        %v1574 = vmul.f32 1.0, %v1573
        %v1575 = vrcp.pop %v1315
        %v1576 = vmul.f32 %v1315, %v1575
        %v1577 = vsub.f32 1.0, %v1576
        %v1578 = vmul.f32 %v1575, %v1577
        %v1579 = vadd.f32 %v1575, %v1578
        %vm1580 = vweird.f32 %v1315
        %vm1581 = vweird.f32 %v1575
        %vm1582 = vmor %vm1580, %vm1581
        %v1583 = vsel %vm1582, %v1575, %v1579
        %v1584 = vand.u32 2147483647, %v1315
        %vm1585 = vcmp.eq.f32.partialorder %v1584, 8.507059e+37
        %v1586 = vand.u32 %v1315, 2147483648
        %v1587 = vor.u32 1.1754944e-38, %v1586
        %v1588 = vsel %vm1585, %v1587, %v1583
        %v1589 = vmul.f32 1.0, %v1588
        %v1590 = vrcp.pop %v1316
        %v1591 = vmul.f32 %v1316, %v1590
        %v1592 = vsub.f32 1.0, %v1591
        %v1593 = vmul.f32 %v1590, %v1592
        %v1594 = vadd.f32 %v1590, %v1593
        %vm1595 = vweird.f32 %v1316
        %vm1596 = vweird.f32 %v1590
        %vm1597 = vmor %vm1595, %vm1596
        %v1598 = vsel %vm1597, %v1590, %v1594
        %v1599 = vand.u32 2147483647, %v1316
        %vm1600 = vcmp.eq.f32.partialorder %v1599, 8.507059e+37
        %v1601 = vand.u32 %v1316, 2147483648
        %v1602 = vor.u32 1.1754944e-38, %v1601
        %v1603 = vsel %vm1600, %v1602, %v1598
        %v1604 = vmul.f32 1.0, %v1603
        %v1605 = vrcp.pop %v1317
        %v1606 = vmul.f32 %v1317, %v1605
        %v1607 = vsub.f32 1.0, %v1606
        %v1608 = vmul.f32 %v1605, %v1607
        %v1609 = vadd.f32 %v1605, %v1608
        %vm1610 = vweird.f32 %v1317
        %vm1611 = vweird.f32 %v1605
        %vm1612 = vmor %vm1610, %vm1611
        %v1613 = vsel %vm1612, %v1605, %v1609
        %v1614 = vand.u32 2147483647, %v1317
        %vm1615 = vcmp.eq.f32.partialorder %v1614, 8.507059e+37
        %v1616 = vand.u32 %v1317, 2147483648
        %v1617 = vor.u32 1.1754944e-38, %v1616
        %v1618 = vsel %vm1615, %v1617, %v1613
        %v1619 = vmul.f32 1.0, %v1618
        %v1620 = vrcp.pop %v1318
        %v1621 = vmul.f32 %v1318, %v1620
        %v1622 = vsub.f32 1.0, %v1621
        %v1623 = vmul.f32 %v1620, %v1622
        %v1624 = vadd.f32 %v1620, %v1623
        %vm1625 = vweird.f32 %v1318
        %vm1626 = vweird.f32 %v1620
        %vm1627 = vmor %vm1625, %vm1626
        %v1628 = vsel %vm1627, %v1620, %v1624
        %v1629 = vand.u32 2147483647, %v1318
        %vm1630 = vcmp.eq.f32.partialorder %v1629, 8.507059e+37
        %v1631 = vand.u32 %v1318, 2147483648
        %v1632 = vor.u32 1.1754944e-38, %v1631
        %v1633 = vsel %vm1630, %v1632, %v1628
        %v1634 = vmul.f32 1.0, %v1633
        %v1635 = vrcp.pop %v1319
        %v1636 = vmul.f32 %v1319, %v1635
        %v1637 = vsub.f32 1.0, %v1636
        %v1638 = vmul.f32 %v1635, %v1637
        %v1639 = vadd.f32 %v1635, %v1638
        %vm1640 = vweird.f32 %v1319
        %vm1641 = vweird.f32 %v1635
        %vm1642 = vmor %vm1640, %vm1641
        %v1643 = vsel %vm1642, %v1635, %v1639
        %v1644 = vand.u32 2147483647, %v1319
        %vm1645 = vcmp.eq.f32.partialorder %v1644, 8.507059e+37
        %v1646 = vand.u32 %v1319, 2147483648
        %v1647 = vor.u32 1.1754944e-38, %v1646
        %v1648 = vsel %vm1645, %v1647, %v1643
        %v1649 = vmul.f32 1.0, %v1648
        %v1650 = vrcp.pop %v1320
        %v1651 = vmul.f32 %v1320, %v1650
        %v1652 = vsub.f32 1.0, %v1651
        %v1653 = vmul.f32 %v1650, %v1652
        %v1654 = vadd.f32 %v1650, %v1653
        %vm1655 = vweird.f32 %v1320
        %vm1656 = vweird.f32 %v1650
        %vm1657 = vmor %vm1655, %vm1656
        %v1658 = vsel %vm1657, %v1650, %v1654
        %v1659 = vand.u32 2147483647, %v1320
        %vm1660 = vcmp.eq.f32.partialorder %v1659, 8.507059e+37
        %v1661 = vand.u32 %v1320, 2147483648
        %v1662 = vor.u32 1.1754944e-38, %v1661
        %v1663 = vsel %vm1660, %v1662, %v1658
        %v1664 = vmul.f32 1.0, %v1663
        %v1665 = vrcp.pop %v1321
        %v1666 = vmul.f32 %v1321, %v1665
        %v1667 = vsub.f32 1.0, %v1666
        %v1668 = vmul.f32 %v1665, %v1667
        %v1669 = vadd.f32 %v1665, %v1668
        %vm1670 = vweird.f32 %v1321
        %vm1671 = vweird.f32 %v1665
        %vm1672 = vmor %vm1670, %vm1671
        %v1673 = vsel %vm1672, %v1665, %v1669
        %v1674 = vand.u32 2147483647, %v1321
        %vm1675 = vcmp.eq.f32.partialorder %v1674, 8.507059e+37
        %v1676 = vand.u32 %v1321, 2147483648
        %v1677 = vor.u32 1.1754944e-38, %v1676
        %v1678 = vsel %vm1675, %v1677, %v1673
        %v1679 = vmul.f32 1.0, %v1678
        %v1680 = vrcp.pop %v1322
        %v1681 = vmul.f32 %v1322, %v1680
        %v1682 = vsub.f32 1.0, %v1681
        %v1683 = vmul.f32 %v1680, %v1682
        %v1684 = vadd.f32 %v1680, %v1683
        %vm1685 = vweird.f32 %v1322
        %vm1686 = vweird.f32 %v1680
        %vm1687 = vmor %vm1685, %vm1686
        %v1688 = vsel %vm1687, %v1680, %v1684
        %v1689 = vand.u32 2147483647, %v1322
        %vm1690 = vcmp.eq.f32.partialorder %v1689, 8.507059e+37
        %v1691 = vand.u32 %v1322, 2147483648
        %v1692 = vor.u32 1.1754944e-38, %v1691
        %v1693 = vsel %vm1690, %v1692, %v1688
        %v1694 = vmul.f32 1.0, %v1693
        %v1695 = vrcp.pop %v1323
        %v1696 = vmul.f32 %v1323, %v1695
        %v1697 = vsub.f32 1.0, %v1696
        %v1698 = vmul.f32 %v1695, %v1697
        %v1699 = vadd.f32 %v1695, %v1698
        %vm1700 = vweird.f32 %v1323
        %vm1701 = vweird.f32 %v1695
        %vm1702 = vmor %vm1700, %vm1701
        %v1703 = vsel %vm1702, %v1695, %v1699
        %v1704 = vand.u32 2147483647, %v1323
        %vm1705 = vcmp.eq.f32.partialorder %v1704, 8.507059e+37
        %v1706 = vand.u32 %v1323, 2147483648
        %v1707 = vor.u32 1.1754944e-38, %v1706
        %v1708 = vsel %vm1705, %v1707, %v1703
        %v1709 = vmul.f32 1.0, %v1708
        %v1710 = vrcp.pop %v1324
        %v1711 = vmul.f32 %v1324, %v1710
        %v1712 = vsub.f32 1.0, %v1711
        %v1713 = vmul.f32 %v1710, %v1712
        %v1714 = vadd.f32 %v1710, %v1713
        %vm1715 = vweird.f32 %v1324
        %vm1716 = vweird.f32 %v1710
        %vm1717 = vmor %vm1715, %vm1716
        %v1718 = vsel %vm1717, %v1710, %v1714
        %v1719 = vand.u32 2147483647, %v1324
        %vm1720 = vcmp.eq.f32.partialorder %v1719, 8.507059e+37
        %v1721 = vand.u32 %v1324, 2147483648
        %v1722 = vor.u32 1.1754944e-38, %v1721
        %v1723 = vsel %vm1720, %v1722, %v1718
        %v1724 = vmul.f32 1.0, %v1723
        %v1725 = vrcp.pop %v1325
        %v1726 = vmul.f32 %v1325, %v1725
        %v1727 = vsub.f32 1.0, %v1726
        %v1728 = vmul.f32 %v1725, %v1727
        %v1729 = vadd.f32 %v1725, %v1728
        %vm1730 = vweird.f32 %v1325
        %vm1731 = vweird.f32 %v1725
        %vm1732 = vmor %vm1730, %vm1731
        %v1733 = vsel %vm1732, %v1725, %v1729
        %v1734 = vand.u32 2147483647, %v1325
        %vm1735 = vcmp.eq.f32.partialorder %v1734, 8.507059e+37
        %v1736 = vand.u32 %v1325, 2147483648
        %v1737 = vor.u32 1.1754944e-38, %v1736
        %v1738 = vsel %vm1735, %v1737, %v1733
        %v1739 = vmul.f32 1.0, %v1738
        %v1740 = vrcp.pop %v1326
        %v1741 = vmul.f32 %v1326, %v1740
        %v1742 = vsub.f32 1.0, %v1741
        %v1743 = vmul.f32 %v1740, %v1742
        %v1744 = vadd.f32 %v1740, %v1743
        %vm1745 = vweird.f32 %v1326
        %vm1746 = vweird.f32 %v1740
        %vm1747 = vmor %vm1745, %vm1746
        %v1748 = vsel %vm1747, %v1740, %v1744
        %v1749 = vand.u32 2147483647, %v1326
        %vm1750 = vcmp.eq.f32.partialorder %v1749, 8.507059e+37
        %v1751 = vand.u32 %v1326, 2147483648
        %v1752 = vor.u32 1.1754944e-38, %v1751
        %v1753 = vsel %vm1750, %v1752, %v1748
        %v1754 = vmul.f32 1.0, %v1753
        %v1755 = vrcp.pop %v1327
        %v1756 = vmul.f32 %v1327, %v1755
        %v1757 = vsub.f32 1.0, %v1756
        %v1758 = vmul.f32 %v1755, %v1757
        %v1759 = vadd.f32 %v1755, %v1758
        %vm1760 = vweird.f32 %v1327
        %vm1761 = vweird.f32 %v1755
        %vm1762 = vmor %vm1760, %vm1761
        %v1763 = vsel %vm1762, %v1755, %v1759
        %v1764 = vand.u32 2147483647, %v1327
        %vm1765 = vcmp.eq.f32.partialorder %v1764, 8.507059e+37
        %v1766 = vand.u32 %v1327, 2147483648
        %v1767 = vor.u32 1.1754944e-38, %v1766
        %v1768 = vsel %vm1765, %v1767, %v1763
        %v1769 = vmul.f32 1.0, %v1768
        %v1770 = vrcp.pop %v1328
        %v1771 = vmul.f32 %v1328, %v1770
        %v1772 = vsub.f32 1.0, %v1771
        %v1773 = vmul.f32 %v1770, %v1772
        %v1774 = vadd.f32 %v1770, %v1773
        %vm1775 = vweird.f32 %v1328
        %vm1776 = vweird.f32 %v1770
        %vm1777 = vmor %vm1775, %vm1776
        %v1778 = vsel %vm1777, %v1770, %v1774
        %v1779 = vand.u32 2147483647, %v1328
        %vm1780 = vcmp.eq.f32.partialorder %v1779, 8.507059e+37
        %v1781 = vand.u32 %v1328, 2147483648
        %v1782 = vor.u32 1.1754944e-38, %v1781
        %v1783 = vsel %vm1780, %v1782, %v1778
        %v1784 = vmul.f32 1.0, %v1783
        %v1785 = vrcp.pop %v1329
        %v1786 = vmul.f32 %v1329, %v1785
        %v1787 = vsub.f32 1.0, %v1786
        %v1788 = vmul.f32 %v1785, %v1787
        %v1789 = vadd.f32 %v1785, %v1788
        %vm1790 = vweird.f32 %v1329
        %vm1791 = vweird.f32 %v1785
        %vm1792 = vmor %vm1790, %vm1791
        %v1793 = vsel %vm1792, %v1785, %v1789
        %v1794 = vand.u32 2147483647, %v1329
        %vm1795 = vcmp.eq.f32.partialorder %v1794, 8.507059e+37
        %v1796 = vand.u32 %v1329, 2147483648
        %v1797 = vor.u32 1.1754944e-38, %v1796
        %v1798 = vsel %vm1795, %v1797, %v1793
        %v1799 = vmul.f32 1.0, %v1798
        %v1800 = vrcp.pop %v1330
        %v1801 = vmul.f32 %v1330, %v1800
        %v1802 = vsub.f32 1.0, %v1801
        %v1803 = vmul.f32 %v1800, %v1802
        %v1804 = vadd.f32 %v1800, %v1803
        %vm1805 = vweird.f32 %v1330
        %vm1806 = vweird.f32 %v1800
        %vm1807 = vmor %vm1805, %vm1806
        %v1808 = vsel %vm1807, %v1800, %v1804
        %v1809 = vand.u32 2147483647, %v1330
        %vm1810 = vcmp.eq.f32.partialorder %v1809, 8.507059e+37
        %v1811 = vand.u32 %v1330, 2147483648
        %v1812 = vor.u32 1.1754944e-38, %v1811
        %v1813 = vsel %vm1810, %v1812, %v1808
        %v1814 = vmul.f32 1.0, %v1813
        %v1815 = vrcp.pop %v1331
        %v1816 = vmul.f32 %v1331, %v1815
        %v1817 = vsub.f32 1.0, %v1816
        %v1818 = vmul.f32 %v1815, %v1817
        %v1819 = vadd.f32 %v1815, %v1818
        %vm1820 = vweird.f32 %v1331
        %vm1821 = vweird.f32 %v1815
        %vm1822 = vmor %vm1820, %vm1821
        %v1823 = vsel %vm1822, %v1815, %v1819
        %v1824 = vand.u32 2147483647, %v1331
        %vm1825 = vcmp.eq.f32.partialorder %v1824, 8.507059e+37
        %v1826 = vand.u32 %v1331, 2147483648
        %v1827 = vor.u32 1.1754944e-38, %v1826
        %v1828 = vsel %vm1825, %v1827, %v1823
        %v1829 = vmul.f32 1.0, %v1828
        %v1830 = vrcp.pop %v1332
        %v1831 = vmul.f32 %v1332, %v1830
        %v1832 = vsub.f32 1.0, %v1831
        %v1833 = vmul.f32 %v1830, %v1832
        %v1834 = vadd.f32 %v1830, %v1833
        %vm1835 = vweird.f32 %v1332
        %vm1836 = vweird.f32 %v1830
        %vm1837 = vmor %vm1835, %vm1836
        %v1838 = vsel %vm1837, %v1830, %v1834
        %v1839 = vand.u32 2147483647, %v1332
        %vm1840 = vcmp.eq.f32.partialorder %v1839, 8.507059e+37
        %v1841 = vand.u32 %v1332, 2147483648
        %v1842 = vor.u32 1.1754944e-38, %v1841
        %v1843 = vsel %vm1840, %v1842, %v1838
        %v1844 = vmul.f32 1.0, %v1843
        %v1845 = vrcp.pop %v1333
        %v1846 = vmul.f32 %v1333, %v1845
        %v1847 = vsub.f32 1.0, %v1846
        %v1848 = vmul.f32 %v1845, %v1847
        %v1849 = vadd.f32 %v1845, %v1848
        %vm1850 = vweird.f32 %v1333
        %vm1851 = vweird.f32 %v1845
        %vm1852 = vmor %vm1850, %vm1851
        %v1853 = vsel %vm1852, %v1845, %v1849
        %v1854 = vand.u32 2147483647, %v1333
        %vm1855 = vcmp.eq.f32.partialorder %v1854, 8.507059e+37
        %v1856 = vand.u32 %v1333, 2147483648
        %v1857 = vor.u32 1.1754944e-38, %v1856
        %v1858 = vsel %vm1855, %v1857, %v1853
        %v1859 = vmul.f32 1.0, %v1858
        %v1860 = vrcp.pop %v1334
        %v1861 = vmul.f32 %v1334, %v1860
        %v1862 = vsub.f32 1.0, %v1861
        %v1863 = vmul.f32 %v1860, %v1862
        %v1864 = vadd.f32 %v1860, %v1863
        %vm1865 = vweird.f32 %v1334
        %vm1866 = vweird.f32 %v1860
        %vm1867 = vmor %vm1865, %vm1866
        %v1868 = vsel %vm1867, %v1860, %v1864
        %v1869 = vand.u32 2147483647, %v1334
        %vm1870 = vcmp.eq.f32.partialorder %v1869, 8.507059e+37
        %v1871 = vand.u32 %v1334, 2147483648
        %v1872 = vor.u32 1.1754944e-38, %v1871
        %v1873 = vsel %vm1870, %v1872, %v1868
        %v1874 = vmul.f32 1.0, %v1873
        %v1875 = vrcp.pop %v1335
        %v1876 = vmul.f32 %v1335, %v1875
        %v1877 = vsub.f32 1.0, %v1876
        %v1878 = vmul.f32 %v1875, %v1877
        %v1879 = vadd.f32 %v1875, %v1878
        %vm1880 = vweird.f32 %v1335
        %vm1881 = vweird.f32 %v1875
        %vm1882 = vmor %vm1880, %vm1881
        %v1883 = vsel %vm1882, %v1875, %v1879
        %v1884 = vand.u32 2147483647, %v1335
        %vm1885 = vcmp.eq.f32.partialorder %v1884, 8.507059e+37
        %v1886 = vand.u32 %v1335, 2147483648
        %v1887 = vor.u32 1.1754944e-38, %v1886
        %v1888 = vsel %vm1885, %v1887, %v1883
        %v1889 = vmul.f32 1.0, %v1888
        %v1890 = vrcp.pop %v1336
        %v1891 = vmul.f32 %v1336, %v1890
        %v1892 = vsub.f32 1.0, %v1891
        %v1893 = vmul.f32 %v1890, %v1892
        %v1894 = vadd.f32 %v1890, %v1893
        %vm1895 = vweird.f32 %v1336
        %vm1896 = vweird.f32 %v1890
        %vm1897 = vmor %vm1895, %vm1896
        %v1898 = vsel %vm1897, %v1890, %v1894
        %v1899 = vand.u32 2147483647, %v1336
        %vm1900 = vcmp.eq.f32.partialorder %v1899, 8.507059e+37
        %v1901 = vand.u32 %v1336, 2147483648
        %v1902 = vor.u32 1.1754944e-38, %v1901
        %v1903 = vsel %vm1900, %v1902, %v1898
        %v1904 = vmul.f32 1.0, %v1903
        %v1905 = vrcp.pop %v1337
        %v1906 = vmul.f32 %v1337, %v1905
        %v1907 = vsub.f32 1.0, %v1906
        %v1908 = vmul.f32 %v1905, %v1907
        %v1909 = vadd.f32 %v1905, %v1908
        %vm1910 = vweird.f32 %v1337
        %vm1911 = vweird.f32 %v1905
        %vm1912 = vmor %vm1910, %vm1911
        %v1913 = vsel %vm1912, %v1905, %v1909
        %v1914 = vand.u32 2147483647, %v1337
        %vm1915 = vcmp.eq.f32.partialorder %v1914, 8.507059e+37
        %v1916 = vand.u32 %v1337, 2147483648
        %v1917 = vor.u32 1.1754944e-38, %v1916
        %v1918 = vsel %vm1915, %v1917, %v1913
        %v1919 = vmul.f32 1.0, %v1918
        %v1920 = vrcp.pop %v1338
        %v1921 = vmul.f32 %v1338, %v1920
        %v1922 = vsub.f32 1.0, %v1921
        %v1923 = vmul.f32 %v1920, %v1922
        %v1924 = vadd.f32 %v1920, %v1923
        %vm1925 = vweird.f32 %v1338
        %vm1926 = vweird.f32 %v1920
        %vm1927 = vmor %vm1925, %vm1926
        %v1928 = vsel %vm1927, %v1920, %v1924
        %v1929 = vand.u32 2147483647, %v1338
        %vm1930 = vcmp.eq.f32.partialorder %v1929, 8.507059e+37
        %v1931 = vand.u32 %v1338, 2147483648
        %v1932 = vor.u32 1.1754944e-38, %v1931
        %v1933 = vsel %vm1930, %v1932, %v1928
        %v1934 = vmul.f32 1.0, %v1933
        %v1935 = vrcp.pop %v1339
        %v1936 = vmul.f32 %v1339, %v1935
        %v1937 = vsub.f32 1.0, %v1936
        %v1938 = vmul.f32 %v1935, %v1937
        %v1939 = vadd.f32 %v1935, %v1938
        %vm1940 = vweird.f32 %v1339
        %vm1941 = vweird.f32 %v1935
        %vm1942 = vmor %vm1940, %vm1941
        %v1943 = vsel %vm1942, %v1935, %v1939
        %v1944 = vand.u32 2147483647, %v1339
        %vm1945 = vcmp.eq.f32.partialorder %v1944, 8.507059e+37
        %v1946 = vand.u32 %v1339, 2147483648
        %v1947 = vor.u32 1.1754944e-38, %v1946
        %v1948 = vsel %vm1945, %v1947, %v1943
        %v1949 = vmul.f32 1.0, %v1948
        %v1950 = vrcp.pop %v1340
        %v1951 = vmul.f32 %v1340, %v1950
        %v1952 = vsub.f32 1.0, %v1951
        %v1953 = vmul.f32 %v1950, %v1952
        %v1954 = vadd.f32 %v1950, %v1953
        %vm1955 = vweird.f32 %v1340
        %vm1956 = vweird.f32 %v1950
        %vm1957 = vmor %vm1955, %vm1956
        %v1958 = vsel %vm1957, %v1950, %v1954
        %v1959 = vand.u32 2147483647, %v1340
        %vm1960 = vcmp.eq.f32.partialorder %v1959, 8.507059e+37
        %v1961 = vand.u32 %v1340, 2147483648
        %v1962 = vor.u32 1.1754944e-38, %v1961
        %v1963 = vsel %vm1960, %v1962, %v1958
        %v1964 = vmul.f32 1.0, %v1963
        %v1965 = vrcp.pop %v1341
        %v1966 = vmul.f32 %v1341, %v1965
        %v1967 = vsub.f32 1.0, %v1966
        %v1968 = vmul.f32 %v1965, %v1967
        %v1969 = vadd.f32 %v1965, %v1968
        %vm1970 = vweird.f32 %v1341
        %vm1971 = vweird.f32 %v1965
        %vm1972 = vmor %vm1970, %vm1971
        %v1973 = vsel %vm1972, %v1965, %v1969
        %v1974 = vand.u32 2147483647, %v1341
        %vm1975 = vcmp.eq.f32.partialorder %v1974, 8.507059e+37
        %v1976 = vand.u32 %v1341, 2147483648
        %v1977 = vor.u32 1.1754944e-38, %v1976
        %v1978 = vsel %vm1975, %v1977, %v1973
        %v1979 = vmul.f32 1.0, %v1978
        %v1980 = vrcp.pop %v1342
        %v1981 = vmul.f32 %v1342, %v1980
        %v1982 = vsub.f32 1.0, %v1981
        %v1983 = vmul.f32 %v1980, %v1982
        %v1984 = vadd.f32 %v1980, %v1983
        %vm1985 = vweird.f32 %v1342
        %vm1986 = vweird.f32 %v1980
        %vm1987 = vmor %vm1985, %vm1986
        %v1988 = vsel %vm1987, %v1980, %v1984
        %v1989 = vand.u32 2147483647, %v1342
        %vm1990 = vcmp.eq.f32.partialorder %v1989, 8.507059e+37
        %v1991 = vand.u32 %v1342, 2147483648
        %v1992 = vor.u32 1.1754944e-38, %v1991
        %v1993 = vsel %vm1990, %v1992, %v1988
        %v1994 = vmul.f32 1.0, %v1993
        %v1995 = vrcp.pop %v1343
        %v1996 = vmul.f32 %v1343, %v1995
        %v1997 = vsub.f32 1.0, %v1996
        %v1998 = vmul.f32 %v1995, %v1997
        %v1999 = vadd.f32 %v1995, %v1998
        %vm2000 = vweird.f32 %v1343
        %vm2001 = vweird.f32 %v1995
        %vm2002 = vmor %vm2000, %vm2001
        %v2003 = vsel %vm2002, %v1995, %v1999
        %v2004 = vand.u32 2147483647, %v1343
        %vm2005 = vcmp.eq.f32.partialorder %v2004, 8.507059e+37
        %v2006 = vand.u32 %v1343, 2147483648
        %v2007 = vor.u32 1.1754944e-38, %v2006
        %v2008 = vsel %vm2005, %v2007, %v2003
        %v2009 = vmul.f32 1.0, %v2008
        %v2010 = vrcp.pop %v1344
        %v2011 = vmul.f32 %v1344, %v2010
        %v2012 = vsub.f32 1.0, %v2011
        %v2013 = vmul.f32 %v2010, %v2012
        %v2014 = vadd.f32 %v2010, %v2013
        %vm2015 = vweird.f32 %v1344
        %vm2016 = vweird.f32 %v2010
        %vm2017 = vmor %vm2015, %vm2016
        %v2018 = vsel %vm2017, %v2010, %v2014
        %v2019 = vand.u32 2147483647, %v1344
        %vm2020 = vcmp.eq.f32.partialorder %v2019, 8.507059e+37
        %v2021 = vand.u32 %v1344, 2147483648
        %v2022 = vor.u32 1.1754944e-38, %v2021
        %v2023 = vsel %vm2020, %v2022, %v2018
        %v2024 = vmul.f32 1.0, %v2023
        %v2025 = vrcp.pop %v1345
        %v2026 = vmul.f32 %v1345, %v2025
        %v2027 = vsub.f32 1.0, %v2026
        %v2028 = vmul.f32 %v2025, %v2027
        %v2029 = vadd.f32 %v2025, %v2028
        %vm2030 = vweird.f32 %v1345
        %vm2031 = vweird.f32 %v2025
        %vm2032 = vmor %vm2030, %vm2031
        %v2033 = vsel %vm2032, %v2025, %v2029
        %v2034 = vand.u32 2147483647, %v1345
        %vm2035 = vcmp.eq.f32.partialorder %v2034, 8.507059e+37
        %v2036 = vand.u32 %v1345, 2147483648
        %v2037 = vor.u32 1.1754944e-38, %v2036
        %v2038 = vsel %vm2035, %v2037, %v2033
        %v2039 = vmul.f32 1.0, %v2038
        %v2040 = vrcp.pop %v1346
        %v2041 = vmul.f32 %v1346, %v2040
        %v2042 = vsub.f32 1.0, %v2041
        %v2043 = vmul.f32 %v2040, %v2042
        %v2044 = vadd.f32 %v2040, %v2043
        %vm2045 = vweird.f32 %v1346
        %vm2046 = vweird.f32 %v2040
        %vm2047 = vmor %vm2045, %vm2046
        %v2048 = vsel %vm2047, %v2040, %v2044
        %v2049 = vand.u32 2147483647, %v1346
        %vm2050 = vcmp.eq.f32.partialorder %v2049, 8.507059e+37
        %v2051 = vand.u32 %v1346, 2147483648
        %v2052 = vor.u32 1.1754944e-38, %v2051
        %v2053 = vsel %vm2050, %v2052, %v2048
        %v2054 = vmul.f32 1.0, %v2053
        %v2055 = vrcp.pop %v1347
        %v2056 = vmul.f32 %v1347, %v2055
        %v2057 = vsub.f32 1.0, %v2056
        %v2058 = vmul.f32 %v2055, %v2057
        %v2059 = vadd.f32 %v2055, %v2058
        %vm2060 = vweird.f32 %v1347
        %vm2061 = vweird.f32 %v2055
        %vm2062 = vmor %vm2060, %vm2061
        %v2063 = vsel %vm2062, %v2055, %v2059
        %v2064 = vand.u32 2147483647, %v1347
        %vm2065 = vcmp.eq.f32.partialorder %v2064, 8.507059e+37
        %v2066 = vand.u32 %v1347, 2147483648
        %v2067 = vor.u32 1.1754944e-38, %v2066
        %v2068 = vsel %vm2065, %v2067, %v2063
        %v2069 = vmul.f32 1.0, %v2068
        %v2070 = vrcp.pop %v1348
        %v2071 = vmul.f32 %v1348, %v2070
        %v2072 = vsub.f32 1.0, %v2071
        %v2073 = vmul.f32 %v2070, %v2072
        %v2074 = vadd.f32 %v2070, %v2073
        %vm2075 = vweird.f32 %v1348
        %vm2076 = vweird.f32 %v2070
        %vm2077 = vmor %vm2075, %vm2076
        %v2078 = vsel %vm2077, %v2070, %v2074
        %v2079 = vand.u32 2147483647, %v1348
        %vm2080 = vcmp.eq.f32.partialorder %v2079, 8.507059e+37
        %v2081 = vand.u32 %v1348, 2147483648
        %v2082 = vor.u32 1.1754944e-38, %v2081
        %v2083 = vsel %vm2080, %v2082, %v2078
        %v2084 = vmul.f32 1.0, %v2083
        %v2085 = vrcp.pop %v1349
        %v2086 = vmul.f32 %v1349, %v2085
        %v2087 = vsub.f32 1.0, %v2086
        %v2088 = vmul.f32 %v2085, %v2087
        %v2089 = vadd.f32 %v2085, %v2088
        %vm2090 = vweird.f32 %v1349
        %vm2091 = vweird.f32 %v2085
        %vm2092 = vmor %vm2090, %vm2091
        %v2093 = vsel %vm2092, %v2085, %v2089
        %v2094 = vand.u32 2147483647, %v1349
        %vm2095 = vcmp.eq.f32.partialorder %v2094, 8.507059e+37
        %v2096 = vand.u32 %v1349, 2147483648
        %v2097 = vor.u32 1.1754944e-38, %v2096
        %v2098 = vsel %vm2095, %v2097, %v2093
        %v2099 = vmul.f32 1.0, %v2098
        %v2100 = vrcp.pop %v1350
        %v2101 = vmul.f32 %v1350, %v2100
        %v2102 = vsub.f32 1.0, %v2101
        %v2103 = vmul.f32 %v2100, %v2102
        %v2104 = vadd.f32 %v2100, %v2103
        %vm2105 = vweird.f32 %v1350
        %vm2106 = vweird.f32 %v2100
        %vm2107 = vmor %vm2105, %vm2106
        %v2108 = vsel %vm2107, %v2100, %v2104
        %v2109 = vand.u32 2147483647, %v1350
        %vm2110 = vcmp.eq.f32.partialorder %v2109, 8.507059e+37
        %v2111 = vand.u32 %v1350, 2147483648
        %v2112 = vor.u32 1.1754944e-38, %v2111
        %v2113 = vsel %vm2110, %v2112, %v2108
        %v2114 = vmul.f32 1.0, %v2113
        %v2115 = vrcp.pop %v1351
        %v2116 = vmul.f32 %v1351, %v2115
        %v2117 = vsub.f32 1.0, %v2116
        %v2118 = vmul.f32 %v2115, %v2117
        %v2119 = vadd.f32 %v2115, %v2118
        %vm2120 = vweird.f32 %v1351
        %vm2121 = vweird.f32 %v2115
        %vm2122 = vmor %vm2120, %vm2121
        %v2123 = vsel %vm2122, %v2115, %v2119
        %v2124 = vand.u32 2147483647, %v1351
        %vm2125 = vcmp.eq.f32.partialorder %v2124, 8.507059e+37
        %v2126 = vand.u32 %v1351, 2147483648
        %v2127 = vor.u32 1.1754944e-38, %v2126
        %v2128 = vsel %vm2125, %v2127, %v2123
        %v2129 = vmul.f32 1.0, %v2128
        %v2130 = vrcp.pop %v1352
        %v2131 = vmul.f32 %v1352, %v2130
        %v2132 = vsub.f32 1.0, %v2131
        %v2133 = vmul.f32 %v2130, %v2132
        %v2134 = vadd.f32 %v2130, %v2133
        %vm2135 = vweird.f32 %v1352
        %vm2136 = vweird.f32 %v2130
        %vm2137 = vmor %vm2135, %vm2136
        %v2138 = vsel %vm2137, %v2130, %v2134
        %v2139 = vand.u32 2147483647, %v1352
        %vm2140 = vcmp.eq.f32.partialorder %v2139, 8.507059e+37
        %v2141 = vand.u32 %v1352, 2147483648
        %v2142 = vor.u32 1.1754944e-38, %v2141
        %v2143 = vsel %vm2140, %v2142, %v2138
        %v2144 = vmul.f32 1.0, %v2143
        %v2145 = vrcp.pop %v1353
        %v2146 = vmul.f32 %v1353, %v2145
        %v2147 = vsub.f32 1.0, %v2146
        %v2148 = vmul.f32 %v2145, %v2147
        %v2149 = vadd.f32 %v2145, %v2148
        %vm2150 = vweird.f32 %v1353
        %vm2151 = vweird.f32 %v2145
        %vm2152 = vmor %vm2150, %vm2151
        %v2153 = vsel %vm2152, %v2145, %v2149
        %v2154 = vand.u32 2147483647, %v1353
        %vm2155 = vcmp.eq.f32.partialorder %v2154, 8.507059e+37
        %v2156 = vand.u32 %v1353, 2147483648
        %v2157 = vor.u32 1.1754944e-38, %v2156
        %v2158 = vsel %vm2155, %v2157, %v2153
        %v2159 = vmul.f32 1.0, %v2158
        %v2160 = vrcp.pop %v1354
        %v2161 = vmul.f32 %v1354, %v2160
        %v2162 = vsub.f32 1.0, %v2161
        %v2163 = vmul.f32 %v2160, %v2162
        %v2164 = vadd.f32 %v2160, %v2163
        %vm2165 = vweird.f32 %v1354
        %vm2166 = vweird.f32 %v2160
        %vm2167 = vmor %vm2165, %vm2166
        %v2168 = vsel %vm2167, %v2160, %v2164
        %v2169 = vand.u32 2147483647, %v1354
        %vm2170 = vcmp.eq.f32.partialorder %v2169, 8.507059e+37
        %v2171 = vand.u32 %v1354, 2147483648
        %v2172 = vor.u32 1.1754944e-38, %v2171
        %v2173 = vsel %vm2170, %v2172, %v2168
        %v2174 = vmul.f32 1.0, %v2173
        %v2175 = vrcp.pop %v1355
        %v2176 = vmul.f32 %v1355, %v2175
        %v2177 = vsub.f32 1.0, %v2176
        %v2178 = vmul.f32 %v2175, %v2177
        %v2179 = vadd.f32 %v2175, %v2178
        %vm2180 = vweird.f32 %v1355
        %vm2181 = vweird.f32 %v2175
        %vm2182 = vmor %vm2180, %vm2181
        %v2183 = vsel %vm2182, %v2175, %v2179
        %v2184 = vand.u32 2147483647, %v1355
        %vm2185 = vcmp.eq.f32.partialorder %v2184, 8.507059e+37
        %v2186 = vand.u32 %v1355, 2147483648
        %v2187 = vor.u32 1.1754944e-38, %v2186
        %v2188 = vsel %vm2185, %v2187, %v2183
        %v2189 = vmul.f32 1.0, %v2188
        %v2190 = vrcp.pop %v1356
        %v2191 = vmul.f32 %v1356, %v2190
        %v2192 = vsub.f32 1.0, %v2191
        %v2193 = vmul.f32 %v2190, %v2192
        %v2194 = vadd.f32 %v2190, %v2193
        %vm2195 = vweird.f32 %v1356
        %vm2196 = vweird.f32 %v2190
        %vm2197 = vmor %vm2195, %vm2196
        %v2198 = vsel %vm2197, %v2190, %v2194
        %v2199 = vand.u32 2147483647, %v1356
        %vm2200 = vcmp.eq.f32.partialorder %v2199, 8.507059e+37
        %v2201 = vand.u32 %v1356, 2147483648
        %v2202 = vor.u32 1.1754944e-38, %v2201
        %v2203 = vsel %vm2200, %v2202, %v2198
        %v2204 = vmul.f32 1.0, %v2203
        %v2205 = vrcp.pop %v1357
        %v2206 = vmul.f32 %v1357, %v2205
        %v2207 = vsub.f32 1.0, %v2206
        %v2208 = vmul.f32 %v2205, %v2207
        %v2209 = vadd.f32 %v2205, %v2208
        %vm2210 = vweird.f32 %v1357
        %vm2211 = vweird.f32 %v2205
        %vm2212 = vmor %vm2210, %vm2211
        %v2213 = vsel %vm2212, %v2205, %v2209
        %v2214 = vand.u32 2147483647, %v1357
        %vm2215 = vcmp.eq.f32.partialorder %v2214, 8.507059e+37
        %v2216 = vand.u32 %v1357, 2147483648
        %v2217 = vor.u32 1.1754944e-38, %v2216
        %v2218 = vsel %vm2215, %v2217, %v2213
        %v2219 = vmul.f32 1.0, %v2218
        %v2220 = vrcp.pop %v1358
        %v2221 = vmul.f32 %v1358, %v2220
        %v2222 = vsub.f32 1.0, %v2221
        %v2223 = vmul.f32 %v2220, %v2222
        %v2224 = vadd.f32 %v2220, %v2223
        %vm2225 = vweird.f32 %v1358
        %vm2226 = vweird.f32 %v2220
        %vm2227 = vmor %vm2225, %vm2226
        %v2228 = vsel %vm2227, %v2220, %v2224
        %v2229 = vand.u32 2147483647, %v1358
        %vm2230 = vcmp.eq.f32.partialorder %v2229, 8.507059e+37
        %v2231 = vand.u32 %v1358, 2147483648
        %v2232 = vor.u32 1.1754944e-38, %v2231
        %v2233 = vsel %vm2230, %v2232, %v2228
        %v2234 = vmul.f32 1.0, %v2233
        %v2235 = vrcp.pop %v1359
        %v2236 = vmul.f32 %v1359, %v2235
        %v2237 = vsub.f32 1.0, %v2236
        %v2238 = vmul.f32 %v2235, %v2237
        %v2239 = vadd.f32 %v2235, %v2238
        %vm2240 = vweird.f32 %v1359
        %vm2241 = vweird.f32 %v2235
        %vm2242 = vmor %vm2240, %vm2241
        %v2243 = vsel %vm2242, %v2235, %v2239
        %v2244 = vand.u32 2147483647, %v1359
        %vm2245 = vcmp.eq.f32.partialorder %v2244, 8.507059e+37
        %v2246 = vand.u32 %v1359, 2147483648
        %v2247 = vor.u32 1.1754944e-38, %v2246
        %v2248 = vsel %vm2245, %v2247, %v2243
        %v2249 = vmul.f32 1.0, %v2248
        %v2250 = vrcp.pop %v1360
        %v2251 = vmul.f32 %v1360, %v2250
        %v2252 = vsub.f32 1.0, %v2251
        %v2253 = vmul.f32 %v2250, %v2252
        %v2254 = vadd.f32 %v2250, %v2253
        %vm2255 = vweird.f32 %v1360
        %vm2256 = vweird.f32 %v2250
        %vm2257 = vmor %vm2255, %vm2256
        %v2258 = vsel %vm2257, %v2250, %v2254
        %v2259 = vand.u32 2147483647, %v1360
        %vm2260 = vcmp.eq.f32.partialorder %v2259, 8.507059e+37
        %v2261 = vand.u32 %v1360, 2147483648
        %v2262 = vor.u32 1.1754944e-38, %v2261
        %v2263 = vsel %vm2260, %v2262, %v2258
        %v2264 = vmul.f32 1.0, %v2263
        %v2265 = vrcp.pop %v1361
        %v2266 = vmul.f32 %v1361, %v2265
        %v2267 = vsub.f32 1.0, %v2266
        %v2268 = vmul.f32 %v2265, %v2267
        %v2269 = vadd.f32 %v2265, %v2268
        %vm2270 = vweird.f32 %v1361
        %vm2271 = vweird.f32 %v2265
        %vm2272 = vmor %vm2270, %vm2271
        %v2273 = vsel %vm2272, %v2265, %v2269
        %v2274 = vand.u32 2147483647, %v1361
        %vm2275 = vcmp.eq.f32.partialorder %v2274, 8.507059e+37
        %v2276 = vand.u32 %v1361, 2147483648
        %v2277 = vor.u32 1.1754944e-38, %v2276
        %v2278 = vsel %vm2275, %v2277, %v2273
        %v2279 = vmul.f32 1.0, %v2278
        %v2280 = vrcp.pop %v1362
        %v2281 = vmul.f32 %v1362, %v2280
        %v2282 = vsub.f32 1.0, %v2281
        %v2283 = vmul.f32 %v2280, %v2282
        %v2284 = vadd.f32 %v2280, %v2283
        %vm2285 = vweird.f32 %v1362
        %vm2286 = vweird.f32 %v2280
        %vm2287 = vmor %vm2285, %vm2286
        %v2288 = vsel %vm2287, %v2280, %v2284
        %v2289 = vand.u32 2147483647, %v1362
        %vm2290 = vcmp.eq.f32.partialorder %v2289, 8.507059e+37
        %v2291 = vand.u32 %v1362, 2147483648
        %v2292 = vor.u32 1.1754944e-38, %v2291
        %v2293 = vsel %vm2290, %v2292, %v2288
        %v2294 = vmul.f32 1.0, %v2293
        %v2295 = vrcp.pop %v1363
        %v2296 = vmul.f32 %v1363, %v2295
        %v2297 = vsub.f32 1.0, %v2296
        %v2298 = vmul.f32 %v2295, %v2297
        %v2299 = vadd.f32 %v2295, %v2298
        %vm2300 = vweird.f32 %v1363
        %vm2301 = vweird.f32 %v2295
        %vm2302 = vmor %vm2300, %vm2301
        %v2303 = vsel %vm2302, %v2295, %v2299
        %v2304 = vand.u32 2147483647, %v1363
        %vm2305 = vcmp.eq.f32.partialorder %v2304, 8.507059e+37
        %v2306 = vand.u32 %v1363, 2147483648
        %v2307 = vor.u32 1.1754944e-38, %v2306
        %v2308 = vsel %vm2305, %v2307, %v2303
        %v2309 = vmul.f32 1.0, %v2308
        %v2310 = vrcp.pop %v1364
        %v2311 = vmul.f32 %v1364, %v2310
        %v2312 = vsub.f32 1.0, %v2311
        %v2313 = vmul.f32 %v2310, %v2312
        %v2314 = vadd.f32 %v2310, %v2313
        %vm2315 = vweird.f32 %v1364
        %vm2316 = vweird.f32 %v2310
        %vm2317 = vmor %vm2315, %vm2316
        %v2318 = vsel %vm2317, %v2310, %v2314
        %v2319 = vand.u32 2147483647, %v1364
        %vm2320 = vcmp.eq.f32.partialorder %v2319, 8.507059e+37
        %v2321 = vand.u32 %v1364, 2147483648
        %v2322 = vor.u32 1.1754944e-38, %v2321
        %v2323 = vsel %vm2320, %v2322, %v2318
        %v2324 = vmul.f32 1.0, %v2323
        %v2325 = vmul.f32 %v763, %v1379
        %v2326 = vmul.f32 %v852, %v1394
        %v2327 = vmul.f32 %v765, %v1409
        %v2328 = vmul.f32 %v854, %v1424
        %v2329 = vmul.f32 %v768, %v1439
        %v2330 = vmul.f32 %v857, %v1454
        %v2331 = vmul.f32 %v770, %v1469
        %v2332 = vmul.f32 %v859, %v1484
        %v2333 = vmul.f32 %v773, %v1499
        %v2334 = vmul.f32 %v862, %v1514
        %v2335 = vmul.f32 %v775, %v1529
        %v2336 = vmul.f32 %v864, %v1544
        %v2337 = vmul.f32 %v778, %v1559
        %v2338 = vmul.f32 %v867, %v1574
        %v2339 = vmul.f32 %v780, %v1589
        %v2340 = vmul.f32 %v869, %v1604
        %v2341 = vmul.f32 %v783, %v1619
        %v2342 = vmul.f32 %v872, %v1634
        %v2343 = vmul.f32 %v785, %v1649
        %v2344 = vmul.f32 %v874, %v1664
        %v2345 = vmul.f32 %v788, %v1679
        %v2346 = vmul.f32 %v877, %v1694
        %v2347 = vmul.f32 %v790, %v1709
        %v2348 = vmul.f32 %v879, %v1724
        %v2349 = vmul.f32 %v793, %v1739
        %v2350 = vmul.f32 %v882, %v1754
        %v2351 = vmul.f32 %v795, %v1769
        %v2352 = vmul.f32 %v884, %v1784
        %v2353 = vmul.f32 %v798, %v1799
        %v2354 = vmul.f32 %v887, %v1814
        %v2355 = vmul.f32 %v800, %v1829
        %v2356 = vmul.f32 %v889, %v1844
        %v2357 = vmul.f32 %v803, %v1859
        %v2358 = vmul.f32 %v892, %v1874
        %v2359 = vmul.f32 %v805, %v1889
        %v2360 = vmul.f32 %v894, %v1904
        %v2361 = vmul.f32 %v808, %v1919
        %v2362 = vmul.f32 %v897, %v1934
        %v2363 = vmul.f32 %v810, %v1949
        %v2364 = vmul.f32 %v899, %v1964
        %v2365 = vmul.f32 %v813, %v1979
        %v2366 = vmul.f32 %v902, %v1994
        %v2367 = vmul.f32 %v815, %v2009
        %v2368 = vmul.f32 %v904, %v2024
        %v2369 = vmul.f32 %v818, %v2039
        %v2370 = vmul.f32 %v907, %v2054
        %v2371 = vmul.f32 %v820, %v2069
        %v2372 = vmul.f32 %v909, %v2084
        %v2373 = vmul.f32 %v823, %v2099
        %v2374 = vmul.f32 %v912, %v2114
        %v2375 = vmul.f32 %v825, %v2129
        %v2376 = vmul.f32 %v914, %v2144
        %v2377 = vmul.f32 %v828, %v2159
        %v2378 = vmul.f32 %v917, %v2174
        %v2379 = vmul.f32 %v830, %v2189
        %v2380 = vmul.f32 %v919, %v2204
        %v2381 = vmul.f32 %v833, %v2219
        %v2382 = vmul.f32 %v922, %v2234
        %v2383 = vmul.f32 %v835, %v2249
        %v2384 = vmul.f32 %v924, %v2264
        %v2385 = vmul.f32 %v838, %v2279
        %v2386 = vmul.f32 %v927, %v2294
        %v2387 = vmul.f32 %v840, %v2309
        %v2388 = vmul.f32 %v929, %v2324
        %v2389 = vmul.f32 %v2325, %v941
        %v2390 = vmul.f32 %v2326, %v1030
        %v2391 = vmul.f32 %v2327, %v943
        %v2392 = vmul.f32 %v2328, %v1032
        %v2393 = vmul.f32 %v2329, %v946
        %v2394 = vmul.f32 %v2330, %v1035
        %v2395 = vmul.f32 %v2331, %v948
        %v2396 = vmul.f32 %v2332, %v1037
        %v2397 = vmul.f32 %v2333, %v951
        %v2398 = vmul.f32 %v2334, %v1040
        %v2399 = vmul.f32 %v2335, %v953
        %v2400 = vmul.f32 %v2336, %v1042
        %v2401 = vmul.f32 %v2337, %v956
        %v2402 = vmul.f32 %v2338, %v1045
        %v2403 = vmul.f32 %v2339, %v958
        %v2404 = vmul.f32 %v2340, %v1047
        %v2405 = vmul.f32 %v2341, %v961
        %v2406 = vmul.f32 %v2342, %v1050
        %v2407 = vmul.f32 %v2343, %v963
        %v2408 = vmul.f32 %v2344, %v1052
        %v2409 = vmul.f32 %v2345, %v966
        %v2410 = vmul.f32 %v2346, %v1055
        %v2411 = vmul.f32 %v2347, %v968
        %v2412 = vmul.f32 %v2348, %v1057
        %v2413 = vmul.f32 %v2349, %v971
        %v2414 = vmul.f32 %v2350, %v1060
        %v2415 = vmul.f32 %v2351, %v973
        %v2416 = vmul.f32 %v2352, %v1062
        %v2417 = vmul.f32 %v2353, %v976
        %v2418 = vmul.f32 %v2354, %v1065
        %v2419 = vmul.f32 %v2355, %v978
        %v2420 = vmul.f32 %v2356, %v1067
        %v2421 = vmul.f32 %v2357, %v981
        %v2422 = vmul.f32 %v2358, %v1070
        %v2423 = vmul.f32 %v2359, %v983
        %v2424 = vmul.f32 %v2360, %v1072
        %v2425 = vmul.f32 %v2361, %v986
        %v2426 = vmul.f32 %v2362, %v1075
        %v2427 = vmul.f32 %v2363, %v988
        %v2428 = vmul.f32 %v2364, %v1077
        %v2429 = vmul.f32 %v2365, %v991
        %v2430 = vmul.f32 %v2366, %v1080
        %v2431 = vmul.f32 %v2367, %v993
        %v2432 = vmul.f32 %v2368, %v1082
        %v2433 = vmul.f32 %v2369, %v996
        %v2434 = vmul.f32 %v2370, %v1085
        %v2435 = vmul.f32 %v2371, %v998
        %v2436 = vmul.f32 %v2372, %v1087
        %v2437 = vmul.f32 %v2373, %v1001
        %v2438 = vmul.f32 %v2374, %v1090
        %v2439 = vmul.f32 %v2375, %v1003
        %v2440 = vmul.f32 %v2376, %v1092
        %v2441 = vmul.f32 %v2377, %v1006
        %v2442 = vmul.f32 %v2378, %v1095
        %v2443 = vmul.f32 %v2379, %v1008
        %v2444 = vmul.f32 %v2380, %v1097
        %v2445 = vmul.f32 %v2381, %v1011
        %v2446 = vmul.f32 %v2382, %v1100
        %v2447 = vmul.f32 %v2383, %v1013
        %v2448 = vmul.f32 %v2384, %v1102
        %v2449 = vmul.f32 %v2385, %v1016
        %v2450 = vmul.f32 %v2386, %v1105
        %v2451 = vmul.f32 %v2387, %v1018
        %v2452 = vmul.f32 %v2388, %v1107
        %v2453 = vld [vmem:[#allocation2] sm:$0xff]
        %v2454 = vld [vmem:[#allocation2 + $0x8] sm:$0xff]
        %v2455 = vld [vmem:[#allocation2 + $0x10] sm:$0xff]
        %v2456 = vld [vmem:[#allocation2 + $0x18] sm:$0xff]
        %v2457 = vld [vmem:[#allocation2 + $0x20] sm:$0xff]
        %v2458 = vld [vmem:[#allocation2 + $0x28] sm:$0xff]
        %v2459 = vld [vmem:[#allocation2 + $0x30] sm:$0xff]
        %v2460 = vld [vmem:[#allocation2 + $0x38] sm:$0xff]
        %v2461 = vld [vmem:[#allocation2 + $0x40] sm:$0xff]
        %v2462 = vld [vmem:[#allocation2 + $0x48] sm:$0xff]
        %v2463 = vld [vmem:[#allocation2 + $0x50] sm:$0xff]
        %v2464 = vld [vmem:[#allocation2 + $0x58] sm:$0xff]
        %v2465 = vld [vmem:[#allocation2 + $0x60] sm:$0xff]
        %v2466 = vld [vmem:[#allocation2 + $0x68] sm:$0xff]
        %v2467 = vld [vmem:[#allocation2 + $0x70] sm:$0xff]
        %v2468 = vld [vmem:[#allocation2 + $0x78] sm:$0xff]
        %v2469 = vld [vmem:[#allocation2 + $0x80] sm:$0xff]
        %v2470 = vld [vmem:[#allocation2 + $0x88] sm:$0xff]
        %v2471 = vld [vmem:[#allocation2 + $0x90] sm:$0xff]
        %v2472 = vld [vmem:[#allocation2 + $0x98] sm:$0xff]
        %v2473 = vld [vmem:[#allocation2 + $0xa0] sm:$0xff]
        %v2474 = vld [vmem:[#allocation2 + $0xa8] sm:$0xff]
        %v2475 = vld [vmem:[#allocation2 + $0xb0] sm:$0xff]
        %v2476 = vld [vmem:[#allocation2 + $0xb8] sm:$0xff]
        %v2477 = vld [vmem:[#allocation2 + $0xc0] sm:$0xff]
        %v2478 = vld [vmem:[#allocation2 + $0xc8] sm:$0xff]
        %v2479 = vld [vmem:[#allocation2 + $0xd0] sm:$0xff]
        %v2480 = vld [vmem:[#allocation2 + $0xd8] sm:$0xff]
        %v2481 = vld [vmem:[#allocation2 + $0xe0] sm:$0xff]
        %v2482 = vld [vmem:[#allocation2 + $0xe8] sm:$0xff]
        %v2483 = vld [vmem:[#allocation2 + $0xf0] sm:$0xff]
        %v2484 = vld [vmem:[#allocation2 + $0xf8] sm:$0xff]
        %v2485 = vpack.c.bf16 %v2391, %v2389
        %v2486 = vpack.c.bf16 %v2392, %v2390
        %v2487 = vpack.c.bf16 %v2395, %v2393
        %v2488 = vpack.c.bf16 %v2396, %v2394
        %v2489 = vpack.c.bf16 %v2399, %v2397
        %v2490 = vpack.c.bf16 %v2400, %v2398
        %v2491 = vpack.c.bf16 %v2403, %v2401
        %v2492 = vpack.c.bf16 %v2404, %v2402
        %v2493 = vpack.c.bf16 %v2407, %v2405
        %v2494 = vpack.c.bf16 %v2408, %v2406
        %v2495 = vpack.c.bf16 %v2411, %v2409
        %v2496 = vpack.c.bf16 %v2412, %v2410
        %v2497 = vpack.c.bf16 %v2415, %v2413
        %v2498 = vpack.c.bf16 %v2416, %v2414
        %v2499 = vpack.c.bf16 %v2419, %v2417
        %v2500 = vpack.c.bf16 %v2420, %v2418
        %v2501 = vpack.c.bf16 %v2423, %v2421
        %v2502 = vpack.c.bf16 %v2424, %v2422
        %v2503 = vpack.c.bf16 %v2427, %v2425
        %v2504 = vpack.c.bf16 %v2428, %v2426
        %v2505 = vpack.c.bf16 %v2431, %v2429
        %v2506 = vpack.c.bf16 %v2432, %v2430
        %v2507 = vpack.c.bf16 %v2435, %v2433
        %v2508 = vpack.c.bf16 %v2436, %v2434
        %v2509 = vpack.c.bf16 %v2439, %v2437
        %v2510 = vpack.c.bf16 %v2440, %v2438
        %v2511 = vpack.c.bf16 %v2443, %v2441
        %v2512 = vpack.c.bf16 %v2444, %v2442
        %v2513 = vpack.c.bf16 %v2447, %v2445
        %v2514 = vpack.c.bf16 %v2448, %v2446
        %v2515 = vpack.c.bf16 %v2451, %v2449
        %v2516 = vpack.c.bf16 %v2452, %v2450
        %v2517 = vld [vmem:[%s334] sm:$0xf]
        %v2518 = vld [vmem:[%s334 + $0x4] sm:$0xf]
        %v2519 = vld [vmem:[%s334 + $0x8] sm:$0xf]
        %v2520 = vld [vmem:[%s334 + $0xc] sm:$0xf]
        %v2521 = vld [vmem:[%s334 + $0x10] sm:$0xf]
        %v2522 = vld [vmem:[%s334 + $0x14] sm:$0xf]
        %v2523 = vld [vmem:[%s334 + $0x18] sm:$0xf]
        %v2524 = vld [vmem:[%s334 + $0x1c] sm:$0xf]
        %v2525 = vld [vmem:[%s334 + $0x20] sm:$0xf]
        %v2526 = vld [vmem:[%s334 + $0x24] sm:$0xf]
        %v2527 = vld [vmem:[%s334 + $0x28] sm:$0xf]
        %v2528 = vld [vmem:[%s334 + $0x2c] sm:$0xf]
        %v2529 = vld [vmem:[%s334 + $0x30] sm:$0xf]
        %v2530 = vld [vmem:[%s334 + $0x34] sm:$0xf]
        %v2531 = vld [vmem:[%s334 + $0x38] sm:$0xf]
        %v2532 = vld [vmem:[%s334 + $0x3c] sm:$0xf]
        %v2533 = vld [vmem:[%s334 + $0x40] sm:$0xf]
        %v2534 = vld [vmem:[%s334 + $0x44] sm:$0xf]
        %v2535 = vld [vmem:[%s334 + $0x48] sm:$0xf]
        %v2536 = vld [vmem:[%s334 + $0x4c] sm:$0xf]
        %v2537 = vld [vmem:[%s334 + $0x50] sm:$0xf]
        %v2538 = vld [vmem:[%s334 + $0x54] sm:$0xf]
        %v2539 = vld [vmem:[%s334 + $0x58] sm:$0xf]
        %v2540 = vld [vmem:[%s334 + $0x5c] sm:$0xf]
        %v2541 = vld [vmem:[%s334 + $0x60] sm:$0xf]
        %v2542 = vld [vmem:[%s334 + $0x64] sm:$0xf]
        %v2543 = vld [vmem:[%s334 + $0x68] sm:$0xf]
        %v2544 = vld [vmem:[%s334 + $0x6c] sm:$0xf]
        %v2545 = vld [vmem:[%s334 + $0x70] sm:$0xf]
        %v2546 = vld [vmem:[%s334 + $0x74] sm:$0xf]
        %v2547 = vld [vmem:[%s334 + $0x78] sm:$0xf]
        %v2548 = vld [vmem:[%s334 + $0x7c] sm:$0xf]
        %v2581 = vunpack.c.l.b16 %v2517
        %v2582 = vunpack.c.l.b16 %v2518
        %v2583 = vunpack.c.l.b16 %v2519
        %v2584 = vunpack.c.l.b16 %v2520
        %v2585 = vunpack.c.l.b16 %v2521
        %v2586 = vunpack.c.l.b16 %v2522
        %v2587 = vunpack.c.l.b16 %v2523
        %v2588 = vunpack.c.l.b16 %v2524
        %v2589 = vunpack.c.l.b16 %v2525
        %v2590 = vunpack.c.l.b16 %v2526
        %v2591 = vunpack.c.l.b16 %v2527
        %v2592 = vunpack.c.l.b16 %v2528
        %v2593 = vunpack.c.l.b16 %v2529
        %v2594 = vunpack.c.l.b16 %v2530
        %v2595 = vunpack.c.l.b16 %v2531
        %v2596 = vunpack.c.l.b16 %v2532
        %v2597 = vunpack.c.l.b16 %v2533
        %v2598 = vunpack.c.l.b16 %v2534
        %v2599 = vunpack.c.l.b16 %v2535
        %v2600 = vunpack.c.l.b16 %v2536
        %v2601 = vunpack.c.l.b16 %v2537
        %v2602 = vunpack.c.l.b16 %v2538
        %v2603 = vunpack.c.l.b16 %v2539
        %v2604 = vunpack.c.l.b16 %v2540
        %v2605 = vunpack.c.l.b16 %v2541
        %v2606 = vunpack.c.l.b16 %v2542
        %v2607 = vunpack.c.l.b16 %v2543
        %v2608 = vunpack.c.l.b16 %v2544
        %v2609 = vunpack.c.l.b16 %v2545
        %v2610 = vunpack.c.l.b16 %v2546
        %v2611 = vunpack.c.l.b16 %v2547
        %v2612 = vunpack.c.l.b16 %v2548
        %v2613 = vpack.c.b16 %v2582, %v2581
        %v2614 = vpack.c.b16 %v2584, %v2583
        %v2615 = vpack.c.b16 %v2586, %v2585
        %v2616 = vpack.c.b16 %v2588, %v2587
        %v2617 = vpack.c.b16 %v2590, %v2589
        %v2618 = vpack.c.b16 %v2592, %v2591
        %v2619 = vpack.c.b16 %v2594, %v2593
        %v2620 = vpack.c.b16 %v2596, %v2595
        %v2621 = vpack.c.b16 %v2598, %v2597
        %v2622 = vpack.c.b16 %v2600, %v2599
        %v2623 = vpack.c.b16 %v2602, %v2601
        %v2624 = vpack.c.b16 %v2604, %v2603
        %v2625 = vpack.c.b16 %v2606, %v2605
        %v2626 = vpack.c.b16 %v2608, %v2607
        %v2627 = vpack.c.b16 %v2610, %v2609
        %v2628 = vpack.c.b16 %v2612, %v2611
        %2645 = vmatpush.bf16.msra.mxu0 %v2620
        %2646 = vmatpush.bf16.msra.mxu0 %v2619
        %2647 = vmatpush.bf16.msra.mxu0 %v2618
        %2648 = vmatpush.bf16.msra.mxu0 %v2617
        %2649 = vmatpush.bf16.msra.mxu0 %v2616
        %2650 = vmatpush.bf16.msra.mxu0 %v2615
        %2651 = vmatpush.bf16.msra.mxu0 %v2614
        %2652 = vmatpush.bf16.msra.mxu0 %v2613
        %2653 = vmatmul.bf16.gmra.mxu0 %v2485
        %v2654 = vpop.f32.mrf.mxu0
        %v2655 = vadd.f32 0.0, %v2654
        %v2656 = vpop.f32.mrf.mxu0
        %v2657 = vadd.f32 0.0, %v2656
        %2658 = vmatmul.bf16.gmra.mxu0 %v2487
        %v2659 = vpop.f32.mrf.mxu0
        %v2660 = vadd.f32 0.0, %v2659
        %v2661 = vpop.f32.mrf.mxu0
        %v2662 = vadd.f32 0.0, %v2661
        %2663 = vmatmul.bf16.gmra.mxu0 %v2489
        %v2664 = vpop.f32.mrf.mxu0
        %v2665 = vadd.f32 0.0, %v2664
        %v2666 = vpop.f32.mrf.mxu0
        %v2667 = vadd.f32 0.0, %v2666
        %2668 = vmatmul.bf16.gmra.mxu0 %v2491
        %v2669 = vpop.f32.mrf.mxu0
        %v2670 = vadd.f32 0.0, %v2669
        %v2671 = vpop.f32.mrf.mxu0
        %v2672 = vadd.f32 0.0, %v2671
        %2673 = vmatmul.bf16.gmra.mxu0 %v2493
        %v2674 = vpop.f32.mrf.mxu0
        %v2675 = vadd.f32 0.0, %v2674
        %v2676 = vpop.f32.mrf.mxu0
        %v2677 = vadd.f32 0.0, %v2676
        %2678 = vmatmul.bf16.gmra.mxu0 %v2495
        %v2679 = vpop.f32.mrf.mxu0
        %v2680 = vadd.f32 0.0, %v2679
        %v2681 = vpop.f32.mrf.mxu0
        %v2682 = vadd.f32 0.0, %v2681
        %2683 = vmatmul.bf16.gmra.mxu0 %v2497
        %v2684 = vpop.f32.mrf.mxu0
        %v2685 = vadd.f32 0.0, %v2684
        %v2686 = vpop.f32.mrf.mxu0
        %v2687 = vadd.f32 0.0, %v2686
        %2688 = vmatmul.bf16.gmra.mxu0 %v2499
        %v2689 = vpop.f32.mrf.mxu0
        %v2690 = vadd.f32 0.0, %v2689
        %v2691 = vpop.f32.mrf.mxu0
        %v2692 = vadd.f32 0.0, %v2691
        %2693 = vmatmul.bf16.gmra.mxu0 %v2501
        %v2694 = vpop.f32.mrf.mxu0
        %v2695 = vadd.f32 0.0, %v2694
        %v2696 = vpop.f32.mrf.mxu0
        %v2697 = vadd.f32 0.0, %v2696
        %2698 = vmatmul.bf16.gmra.mxu0 %v2503
        %v2699 = vpop.f32.mrf.mxu0
        %v2700 = vadd.f32 0.0, %v2699
        %v2701 = vpop.f32.mrf.mxu0
        %v2702 = vadd.f32 0.0, %v2701
        %2703 = vmatmul.bf16.gmra.mxu0 %v2505
        %v2704 = vpop.f32.mrf.mxu0
        %v2705 = vadd.f32 0.0, %v2704
        %v2706 = vpop.f32.mrf.mxu0
        %v2707 = vadd.f32 0.0, %v2706
        %2708 = vmatmul.bf16.gmra.mxu0 %v2507
        %v2709 = vpop.f32.mrf.mxu0
        %v2710 = vadd.f32 0.0, %v2709
        %v2711 = vpop.f32.mrf.mxu0
        %v2712 = vadd.f32 0.0, %v2711
        %2713 = vmatmul.bf16.gmra.mxu0 %v2509
        %v2714 = vpop.f32.mrf.mxu0
        %v2715 = vadd.f32 0.0, %v2714
        %v2716 = vpop.f32.mrf.mxu0
        %v2717 = vadd.f32 0.0, %v2716
        %2718 = vmatmul.bf16.gmra.mxu0 %v2511
        %v2719 = vpop.f32.mrf.mxu0
        %v2720 = vadd.f32 0.0, %v2719
        %v2721 = vpop.f32.mrf.mxu0
        %v2722 = vadd.f32 0.0, %v2721
        %2723 = vmatmul.bf16.gmra.mxu0 %v2513
        %v2724 = vpop.f32.mrf.mxu0
        %v2725 = vadd.f32 0.0, %v2724
        %v2726 = vpop.f32.mrf.mxu0
        %v2727 = vadd.f32 0.0, %v2726
        %2728 = vmatmul.bf16.gmra.mxu0 %v2515
        %v2729 = vpop.f32.mrf.mxu0
        %v2730 = vadd.f32 0.0, %v2729
        %v2731 = vpop.f32.mrf.mxu0
        %v2732 = vadd.f32 0.0, %v2731
        %2733 = vdwg.mxu0
        %2734 = vmatpush.bf16.msra.mxu0 %v2628
        %2735 = vmatpush.bf16.msra.mxu0 %v2627
        %2736 = vmatpush.bf16.msra.mxu0 %v2626
        %2737 = vmatpush.bf16.msra.mxu0 %v2625
        %2738 = vmatpush.bf16.msra.mxu0 %v2624
        %2739 = vmatpush.bf16.msra.mxu0 %v2623
        %2740 = vmatpush.bf16.msra.mxu0 %v2622
        %2741 = vmatpush.bf16.msra.mxu0 %v2621
        %2742 = vmatmul.bf16.gmra.mxu0 %v2486
        %v2743 = vpop.f32.mrf.mxu0
        %v2744 = vadd.f32 %v2655, %v2743
        %v2745 = vpop.f32.mrf.mxu0
        %v2746 = vadd.f32 %v2657, %v2745
        %2747 = vmatmul.bf16.gmra.mxu0 %v2488
        %v2748 = vpop.f32.mrf.mxu0
        %v2749 = vadd.f32 %v2660, %v2748
        %v2750 = vpop.f32.mrf.mxu0
        %v2751 = vadd.f32 %v2662, %v2750
        %2752 = vmatmul.bf16.gmra.mxu0 %v2490
        %v2753 = vpop.f32.mrf.mxu0
        %v2754 = vadd.f32 %v2665, %v2753
        %v2755 = vpop.f32.mrf.mxu0
        %v2756 = vadd.f32 %v2667, %v2755
        %2757 = vmatmul.bf16.gmra.mxu0 %v2492
        %v2758 = vpop.f32.mrf.mxu0
        %v2759 = vadd.f32 %v2670, %v2758
        %v2760 = vpop.f32.mrf.mxu0
        %v2761 = vadd.f32 %v2672, %v2760
        %2762 = vmatmul.bf16.gmra.mxu0 %v2494
        %v2763 = vpop.f32.mrf.mxu0
        %v2764 = vadd.f32 %v2675, %v2763
        %v2765 = vpop.f32.mrf.mxu0
        %v2766 = vadd.f32 %v2677, %v2765
        %2767 = vmatmul.bf16.gmra.mxu0 %v2496
        %v2768 = vpop.f32.mrf.mxu0
        %v2769 = vadd.f32 %v2680, %v2768
        %v2770 = vpop.f32.mrf.mxu0
        %v2771 = vadd.f32 %v2682, %v2770
        %2772 = vmatmul.bf16.gmra.mxu0 %v2498
        %v2773 = vpop.f32.mrf.mxu0
        %v2774 = vadd.f32 %v2685, %v2773
        %v2775 = vpop.f32.mrf.mxu0
        %v2776 = vadd.f32 %v2687, %v2775
        %2777 = vmatmul.bf16.gmra.mxu0 %v2500
        %v2778 = vpop.f32.mrf.mxu0
        %v2779 = vadd.f32 %v2690, %v2778
        %v2780 = vpop.f32.mrf.mxu0
        %v2781 = vadd.f32 %v2692, %v2780
        %2782 = vmatmul.bf16.gmra.mxu0 %v2502
        %v2783 = vpop.f32.mrf.mxu0
        %v2784 = vadd.f32 %v2695, %v2783
        %v2785 = vpop.f32.mrf.mxu0
        %v2786 = vadd.f32 %v2697, %v2785
        %2787 = vmatmul.bf16.gmra.mxu0 %v2504
        %v2788 = vpop.f32.mrf.mxu0
        %v2789 = vadd.f32 %v2700, %v2788
        %v2790 = vpop.f32.mrf.mxu0
        %v2791 = vadd.f32 %v2702, %v2790
        %2792 = vmatmul.bf16.gmra.mxu0 %v2506
        %v2793 = vpop.f32.mrf.mxu0
        %v2794 = vadd.f32 %v2705, %v2793
        %v2795 = vpop.f32.mrf.mxu0
        %v2796 = vadd.f32 %v2707, %v2795
        %2797 = vmatmul.bf16.gmra.mxu0 %v2508
        %v2798 = vpop.f32.mrf.mxu0
        %v2799 = vadd.f32 %v2710, %v2798
        %v2800 = vpop.f32.mrf.mxu0
        %v2801 = vadd.f32 %v2712, %v2800
        %2802 = vmatmul.bf16.gmra.mxu0 %v2510
        %v2803 = vpop.f32.mrf.mxu0
        %v2804 = vadd.f32 %v2715, %v2803
        %v2805 = vpop.f32.mrf.mxu0
        %v2806 = vadd.f32 %v2717, %v2805
        %2807 = vmatmul.bf16.gmra.mxu0 %v2512
        %v2808 = vpop.f32.mrf.mxu0
        %v2809 = vadd.f32 %v2720, %v2808
        %v2810 = vpop.f32.mrf.mxu0
        %v2811 = vadd.f32 %v2722, %v2810
        %2812 = vmatmul.bf16.gmra.mxu0 %v2514
        %v2813 = vpop.f32.mrf.mxu0
        %v2814 = vadd.f32 %v2725, %v2813
        %v2815 = vpop.f32.mrf.mxu0
        %v2816 = vadd.f32 %v2727, %v2815
        %2817 = vmatmul.bf16.gmra.mxu0 %v2516
        %v2818 = vpop.f32.mrf.mxu0
        %v2819 = vadd.f32 %v2730, %v2818
        %v2820 = vpop.f32.mrf.mxu0
        %v2821 = vadd.f32 %v2732, %v2820
        %2822 = vdwg.mxu0
        %v2823 = vadd.f32 %v2453, %v2744
        %v2824 = vadd.f32 %v2454, %v2746
        %v2825 = vadd.f32 %v2455, %v2749
        %v2826 = vadd.f32 %v2456, %v2751
        %v2827 = vadd.f32 %v2457, %v2754
        %v2828 = vadd.f32 %v2458, %v2756
        %v2829 = vadd.f32 %v2459, %v2759
        %v2830 = vadd.f32 %v2460, %v2761
        %v2831 = vadd.f32 %v2461, %v2764
        %v2832 = vadd.f32 %v2462, %v2766
        %v2833 = vadd.f32 %v2463, %v2769
        %v2834 = vadd.f32 %v2464, %v2771
        %v2835 = vadd.f32 %v2465, %v2774
        %v2836 = vadd.f32 %v2466, %v2776
        %v2837 = vadd.f32 %v2467, %v2779
        %v2838 = vadd.f32 %v2468, %v2781
        %v2839 = vadd.f32 %v2469, %v2784
        %v2840 = vadd.f32 %v2470, %v2786
        %v2841 = vadd.f32 %v2471, %v2789
        %v2842 = vadd.f32 %v2472, %v2791
        %v2843 = vadd.f32 %v2473, %v2794
        %v2844 = vadd.f32 %v2474, %v2796
        %v2845 = vadd.f32 %v2475, %v2799
        %v2846 = vadd.f32 %v2476, %v2801
        %v2847 = vadd.f32 %v2477, %v2804
        %v2848 = vadd.f32 %v2478, %v2806
        %v2849 = vadd.f32 %v2479, %v2809
        %v2850 = vadd.f32 %v2480, %v2811
        %v2851 = vadd.f32 %v2481, %v2814
        %v2852 = vadd.f32 %v2482, %v2816
        %v2853 = vadd.f32 %v2483, %v2819
        %v2854 = vadd.f32 %v2484, %v2821
        %2855 = vst [vmem:[#allocation2] sm:$0xff] %v2823
        %2856 = vst [vmem:[#allocation2 + $0x8] sm:$0xff] %v2824
        %2857 = vst [vmem:[#allocation2 + $0x10] sm:$0xff] %v2825
        %2858 = vst [vmem:[#allocation2 + $0x18] sm:$0xff] %v2826
        %2859 = vst [vmem:[#allocation2 + $0x20] sm:$0xff] %v2827
        %2860 = vst [vmem:[#allocation2 + $0x28] sm:$0xff] %v2828
        %2861 = vst [vmem:[#allocation2 + $0x30] sm:$0xff] %v2829
        %2862 = vst [vmem:[#allocation2 + $0x38] sm:$0xff] %v2830
        %2863 = vst [vmem:[#allocation2 + $0x40] sm:$0xff] %v2831
        %2864 = vst [vmem:[#allocation2 + $0x48] sm:$0xff] %v2832
        %2865 = vst [vmem:[#allocation2 + $0x50] sm:$0xff] %v2833
        %2866 = vst [vmem:[#allocation2 + $0x58] sm:$0xff] %v2834
        %2867 = vst [vmem:[#allocation2 + $0x60] sm:$0xff] %v2835
        %2868 = vst [vmem:[#allocation2 + $0x68] sm:$0xff] %v2836
        %2869 = vst [vmem:[#allocation2 + $0x70] sm:$0xff] %v2837
        %2870 = vst [vmem:[#allocation2 + $0x78] sm:$0xff] %v2838
        %2871 = vst [vmem:[#allocation2 + $0x80] sm:$0xff] %v2839
        %2872 = vst [vmem:[#allocation2 + $0x88] sm:$0xff] %v2840
        %2873 = vst [vmem:[#allocation2 + $0x90] sm:$0xff] %v2841
        %2874 = vst [vmem:[#allocation2 + $0x98] sm:$0xff] %v2842
        %2875 = vst [vmem:[#allocation2 + $0xa0] sm:$0xff] %v2843
        %2876 = vst [vmem:[#allocation2 + $0xa8] sm:$0xff] %v2844
        %2877 = vst [vmem:[#allocation2 + $0xb0] sm:$0xff] %v2845
        %2878 = vst [vmem:[#allocation2 + $0xb8] sm:$0xff] %v2846
        %2879 = vst [vmem:[#allocation2 + $0xc0] sm:$0xff] %v2847
        %2880 = vst [vmem:[#allocation2 + $0xc8] sm:$0xff] %v2848
        %2881 = vst [vmem:[#allocation2 + $0xd0] sm:$0xff] %v2849
        %2882 = vst [vmem:[#allocation2 + $0xd8] sm:$0xff] %v2850
        %2883 = vst [vmem:[#allocation2 + $0xe0] sm:$0xff] %v2851
        %2884 = vst [vmem:[#allocation2 + $0xe8] sm:$0xff] %v2852
        %2885 = vst [vmem:[#allocation2 + $0xf0] sm:$0xff] %v2853
        %2886 = vst [vmem:[#allocation2 + $0xf8] sm:$0xff] %v2854
        %p2887 = scmp.eq.s32.totalorder %s33, 1
        // Predicated region
        $region61: #{tpu_custom_call.1} parent=39 // pred_check
          %p2888 = pneg %p2887
        $region62: #{tpu_custom_call.1} parent=39 // pred_check_branch
          %2890 = sbr.rel (%p2888) target = $region64
        $region63: #{tpu_custom_call.1} parent=39 // pred_region
          %v2891 = vld [vmem:[#allocation2] sm:$0xff]
          %v2892 = vld [vmem:[#allocation2 + $0x8] sm:$0xff]
          %v2893 = vld [vmem:[#allocation2 + $0x10] sm:$0xff]
          %v2894 = vld [vmem:[#allocation2 + $0x18] sm:$0xff]
          %v2895 = vld [vmem:[#allocation2 + $0x20] sm:$0xff]
          %v2896 = vld [vmem:[#allocation2 + $0x28] sm:$0xff]
          %v2897 = vld [vmem:[#allocation2 + $0x30] sm:$0xff]
          %v2898 = vld [vmem:[#allocation2 + $0x38] sm:$0xff]
          %v2899 = vld [vmem:[#allocation2 + $0x40] sm:$0xff]
          %v2900 = vld [vmem:[#allocation2 + $0x48] sm:$0xff]
          %v2901 = vld [vmem:[#allocation2 + $0x50] sm:$0xff]
          %v2902 = vld [vmem:[#allocation2 + $0x58] sm:$0xff]
          %v2903 = vld [vmem:[#allocation2 + $0x60] sm:$0xff]
          %v2904 = vld [vmem:[#allocation2 + $0x68] sm:$0xff]
          %v2905 = vld [vmem:[#allocation2 + $0x70] sm:$0xff]
          %v2906 = vld [vmem:[#allocation2 + $0x78] sm:$0xff]
          %v2907 = vld [vmem:[#allocation2 + $0x80] sm:$0xff]
          %v2908 = vld [vmem:[#allocation2 + $0x88] sm:$0xff]
          %v2909 = vld [vmem:[#allocation2 + $0x90] sm:$0xff]
          %v2910 = vld [vmem:[#allocation2 + $0x98] sm:$0xff]
          %v2911 = vld [vmem:[#allocation2 + $0xa0] sm:$0xff]
          %v2912 = vld [vmem:[#allocation2 + $0xa8] sm:$0xff]
          %v2913 = vld [vmem:[#allocation2 + $0xb0] sm:$0xff]
          %v2914 = vld [vmem:[#allocation2 + $0xb8] sm:$0xff]
          %v2915 = vld [vmem:[#allocation2 + $0xc0] sm:$0xff]
          %v2916 = vld [vmem:[#allocation2 + $0xc8] sm:$0xff]
          %v2917 = vld [vmem:[#allocation2 + $0xd0] sm:$0xff]
          %v2918 = vld [vmem:[#allocation2 + $0xd8] sm:$0xff]
          %v2919 = vld [vmem:[#allocation2 + $0xe0] sm:$0xff]
          %v2920 = vld [vmem:[#allocation2 + $0xe8] sm:$0xff]
          %v2921 = vld [vmem:[#allocation2 + $0xf0] sm:$0xff]
          %v2922 = vld [vmem:[#allocation2 + $0xf8] sm:$0xff]
          %v2923 = vld [vmem:[%s4] sm:$0x1]
          %v2924 = vunpack.c.l.bf16 %v2923
          %v2925 = vperm.slane %v2924, 0
          %v2926 = vadd.f32 %v2891, %v2925
          %v2927 = vadd.f32 %v2892, %v2925
          %v2928 = vadd.f32 %v2893, %v2925
          %v2929 = vadd.f32 %v2894, %v2925
          %v2930 = vadd.f32 %v2895, %v2925
          %v2931 = vadd.f32 %v2896, %v2925
          %v2932 = vadd.f32 %v2897, %v2925
          %v2933 = vadd.f32 %v2898, %v2925
          %v2934 = vadd.f32 %v2899, %v2925
          %v2935 = vadd.f32 %v2900, %v2925
          %v2936 = vadd.f32 %v2901, %v2925
          %v2937 = vadd.f32 %v2902, %v2925
          %v2938 = vadd.f32 %v2903, %v2925
          %v2939 = vadd.f32 %v2904, %v2925
          %v2940 = vadd.f32 %v2905, %v2925
          %v2941 = vadd.f32 %v2906, %v2925
          %v2942 = vadd.f32 %v2907, %v2925
          %v2943 = vadd.f32 %v2908, %v2925
          %v2944 = vadd.f32 %v2909, %v2925
          %v2945 = vadd.f32 %v2910, %v2925
          %v2946 = vadd.f32 %v2911, %v2925
          %v2947 = vadd.f32 %v2912, %v2925
          %v2948 = vadd.f32 %v2913, %v2925
          %v2949 = vadd.f32 %v2914, %v2925
          %v2950 = vadd.f32 %v2915, %v2925
          %v2951 = vadd.f32 %v2916, %v2925
          %v2952 = vadd.f32 %v2917, %v2925
          %v2953 = vadd.f32 %v2918, %v2925
          %v2954 = vadd.f32 %v2919, %v2925
          %v2955 = vadd.f32 %v2920, %v2925
          %v2956 = vadd.f32 %v2921, %v2925
          %v2957 = vadd.f32 %v2922, %v2925
          %v2958 = vpack.c.bf16 %v2926, %v2926
          %v2959 = vpack.c.bf16 %v2927, %v2927
          %v2960 = vpack.c.bf16 %v2928, %v2928
          %v2961 = vpack.c.bf16 %v2929, %v2929
          %v2962 = vpack.c.bf16 %v2930, %v2930
          %v2963 = vpack.c.bf16 %v2931, %v2931
          %v2964 = vpack.c.bf16 %v2932, %v2932
          %v2965 = vpack.c.bf16 %v2933, %v2933
          %v2966 = vpack.c.bf16 %v2934, %v2934
          %v2967 = vpack.c.bf16 %v2935, %v2935
          %v2968 = vpack.c.bf16 %v2936, %v2936
          %v2969 = vpack.c.bf16 %v2937, %v2937
          %v2970 = vpack.c.bf16 %v2938, %v2938
          %v2971 = vpack.c.bf16 %v2939, %v2939
          %v2972 = vpack.c.bf16 %v2940, %v2940
          %v2973 = vpack.c.bf16 %v2941, %v2941
          %v2974 = vpack.c.bf16 %v2942, %v2942
          %v2975 = vpack.c.bf16 %v2943, %v2943
          %v2976 = vpack.c.bf16 %v2944, %v2944
          %v2977 = vpack.c.bf16 %v2945, %v2945
          %v2978 = vpack.c.bf16 %v2946, %v2946
          %v2979 = vpack.c.bf16 %v2947, %v2947
          %v2980 = vpack.c.bf16 %v2948, %v2948
          %v2981 = vpack.c.bf16 %v2949, %v2949
          %v2982 = vpack.c.bf16 %v2950, %v2950
          %v2983 = vpack.c.bf16 %v2951, %v2951
          %v2984 = vpack.c.bf16 %v2952, %v2952
          %v2985 = vpack.c.bf16 %v2953, %v2953
          %v2986 = vpack.c.bf16 %v2954, %v2954
          %v2987 = vpack.c.bf16 %v2955, %v2955
          %v2988 = vpack.c.bf16 %v2956, %v2956
          %v2989 = vpack.c.bf16 %v2957, %v2957
          %2990 = vst [vmem:[%s376] sm:$0xf] %v2958
          %2991 = vst [vmem:[%s376 + $0x4] sm:$0xf] %v2959
          %2992 = vst [vmem:[%s376 + $0x8] sm:$0xf] %v2960
          %2993 = vst [vmem:[%s376 + $0xc] sm:$0xf] %v2961
          %2994 = vst [vmem:[%s376 + $0x10] sm:$0xf] %v2962
          %2995 = vst [vmem:[%s376 + $0x14] sm:$0xf] %v2963
          %2996 = vst [vmem:[%s376 + $0x18] sm:$0xf] %v2964
          %2997 = vst [vmem:[%s376 + $0x1c] sm:$0xf] %v2965
          %2998 = vst [vmem:[%s376 + $0x20] sm:$0xf] %v2966
          %2999 = vst [vmem:[%s376 + $0x24] sm:$0xf] %v2967
          %3000 = vst [vmem:[%s376 + $0x28] sm:$0xf] %v2968
          %3001 = vst [vmem:[%s376 + $0x2c] sm:$0xf] %v2969
          %3002 = vst [vmem:[%s376 + $0x30] sm:$0xf] %v2970
          %3003 = vst [vmem:[%s376 + $0x34] sm:$0xf] %v2971
          %3004 = vst [vmem:[%s376 + $0x38] sm:$0xf] %v2972
          %3005 = vst [vmem:[%s376 + $0x3c] sm:$0xf] %v2973
          %3006 = vst [vmem:[%s376 + $0x40] sm:$0xf] %v2974
          %3007 = vst [vmem:[%s376 + $0x44] sm:$0xf] %v2975
          %3008 = vst [vmem:[%s376 + $0x48] sm:$0xf] %v2976
          %3009 = vst [vmem:[%s376 + $0x4c] sm:$0xf] %v2977
          %3010 = vst [vmem:[%s376 + $0x50] sm:$0xf] %v2978
          %3011 = vst [vmem:[%s376 + $0x54] sm:$0xf] %v2979
          %3012 = vst [vmem:[%s376 + $0x58] sm:$0xf] %v2980
          %3013 = vst [vmem:[%s376 + $0x5c] sm:$0xf] %v2981
          %3014 = vst [vmem:[%s376 + $0x60] sm:$0xf] %v2982
          %3015 = vst [vmem:[%s376 + $0x64] sm:$0xf] %v2983
          %3016 = vst [vmem:[%s376 + $0x68] sm:$0xf] %v2984
          %3017 = vst [vmem:[%s376 + $0x6c] sm:$0xf] %v2985
          %3018 = vst [vmem:[%s376 + $0x70] sm:$0xf] %v2986
          %3019 = vst [vmem:[%s376 + $0x74] sm:$0xf] %v2987
          %3020 = vst [vmem:[%s376 + $0x78] sm:$0xf] %v2988
          %3021 = vst [vmem:[%s376 + $0x7c] sm:$0xf] %v2989
        $region64: #{tpu_custom_call.1} parent=39 // pred_fallthru
          _
        %s3022 = sand.u32 %s173, 1
        %s3023 = scalar_lea.sflag [#allocation5], %s3022
        %s3024 = sand.u32 %s173, 1
        %s3025 = smul.addr %s3024, 128
        %s3026 = scalar_lea.vmem [#allocation11], %s3025
        // Predicated region
        $region65: #{tpu_custom_call.1} parent=39 // pred_check
          %p3027 = pneg %p183
        $region66: #{tpu_custom_call.1} parent=39 // pred_check_branch
          %3029 = sbr.rel (%p3027) target = $region68
        $region67: #{tpu_custom_call.1} parent=39 // pred_region
          %s3030 = smul.u32 32, %s32
          %3032 = vsyncadd %s3023, 0
          %s3033 = smul.addr %s3030, 4
          %s3034 = scalar_lea.hbm %s5, %s3033
          %s3035 = sshll.u32 %s3026, 4
          %s3036 = int_to_ptr.vmem [resolvable:$true] %s3035
          %s3037 = sshll.u32 %s3034, 4
          %s3038 = int_to_ptr.hbm [resolvable:$true] %s3037
          %3043 = dma.vmem_to_hbm [thread:$0]  %s3036, 2048, %s3038, %s3023, 64, 64, 4
        $region68: #{tpu_custom_call.1} parent=39 // pred_fallthru
          _
      $region40: #{tpu_custom_call.1} parent=5 // pred_fallthru
        _
      %p3044 = scmp.le.s32.totalorder 2, %s23
      // Predicated region
      $region69: #{tpu_custom_call.1} parent=5 // pred_check
        %p3045 = pneg %p3044
      $region70: #{tpu_custom_call.1} parent=5 // pred_check_branch
        %3047 = sbr.rel (%p3045) target = $region72
      $region71: #{tpu_custom_call.1} parent=5 // pred_region
        %s3048 = ssub.s32 %s23, 2
        // Predicated region
        $region73: #{tpu_custom_call.1} parent=71 // pred_check
          %p3049 = pneg %p189
        $region74: #{tpu_custom_call.1} parent=71 // pred_check_branch
          %3051 = sbr.rel (%p3049) target = $region76
        $region75: #{tpu_custom_call.1} parent=71 // pred_region
          %s3052 = sand.u32 %s174, 1
          %s3053 = scalar_lea.sflag [#allocation5], %s3052
          %s3054 = sand.u32 %s174, 1
          %s3055 = smul.addr %s3054, 128
          %s3056 = scalar_lea.vmem [#allocation11], %s3055
          %3058 = dma.done %s3053, 2048
        $region76: #{tpu_custom_call.1} parent=71 // pred_fallthru
          _
      $region72: #{tpu_custom_call.1} parent=5 // pred_fallthru
        _
    $region6: #{tpu_custom_call.1} parent=1 // loop_footer
      %s27 = sadd.s32 1, %s23
    $region7: #{tpu_custom_call.1} parent=1 // loop_footer_branch
      %22 = sbr.rel target = $region3
    $region8: #{tpu_custom_call.1} parent=1 // loop_exit
      _
    %3059 = vsyncpa [#allocation4], 1
    %s3060 = scalar_lea.sflag [#allocation4], 1
    %3061 = vsyncpa %s3060, 1
    %3062 = vsyncpa [#allocation7], 1
    %s3063 = scalar_lea.sflag [#allocation7], 1
    %3064 = vsyncpa %s3063, 1
    %3065 = vsyncpa [#allocation10], 1
    %s3066 = scalar_lea.sflag [#allocation10], 1
    %3067 = vsyncpa %s3066, 1
    %3068 = vsyncpa [#allocation5], 1
    %s3069 = scalar_lea.sflag [#allocation5], 1
    %3070 = vsyncpa %s3069, 1

</llo_original>
